<compile_context>
chip_gen: v7x
topology: tpu7x:2x2x1
jax: 0.10.0
libtpu: 0.0.40
codegen_flags: <defaults>
</compile_context>

<pallas_src>
import jax
import jax.numpy as jnp
from jax.experimental import pallas as pl
from jax.experimental.pallas import tpu as pltpu


# ---------------------------------------------------------------------------
# Model dimensions (lane-dense: every last dim is a multiple of 128)
# ---------------------------------------------------------------------------
WIN = 256        # analysis window (samples) == 2 * HOP
HOP = 128        # hop size (== TPU lane width)
F_MEL = 128      # learned filterbank bins (lane-padded)
C_DIM = 128      # model channel width
N_BLOCKS = 2     # number of ReDim blocks
ATT_HID = 128    # attention hidden dim (lane-padded)
EMB_DIM = 192    # ReDimNet embedding dimension
EMB_PAD = 256    # lane-dense padded embedding width (sliced to EMB_DIM outside)


# ---------------------------------------------------------------------------
# Fused Pallas kernel: one grid step == one batch element, end-to-end forward
# ---------------------------------------------------------------------------
def _redimnet_fused_kernel(audio_ref, wfb_ref, bfb_ref, wst_ref, bst_ref,
                           wt_ref, bt_ref, wc_ref, bc_ref,
                           wa1_ref, ba1_ref, wa2_ref,
                           wemb_ref, bemb_ref, o_ref):
    f32 = jnp.float32
    bf16 = jnp.bfloat16

    T = audio_ref.shape[1] - 1          # number of frames (static)
    n_blocks = wt_ref.shape[0]

    # ---- framing: WIN == 2*HOP, so frame t = [chunk t, chunk t+1] ----------
    c0 = audio_ref[0, 0:T, :]           # [T, HOP]
    c1 = audio_ref[0, 1:T + 1, :]       # [T, HOP]
    frames = jnp.concatenate([c0, c1], axis=-1).astype(bf16)   # [T, WIN]

    # ---- learned log filterbank -------------------------------------------
    feat = jnp.dot(frames, wfb_ref[...], preferred_element_type=f32)
    feat = feat + bfb_ref[...]
    feat = jnp.log(jnp.maximum(feat, 0.0) + 1.0)                # log1p(relu)

    # ---- channel stem -------------------------------------------------------
    h = jnp.dot(feat.astype(bf16), wst_ref[...], preferred_element_type=f32)
    h = jax.nn.gelu(h + bst_ref[...], approximate=True)         # [T, C] f32

    # ---- ReDim blocks: time mixing + channel mixing, residual --------------
    for i in range(n_blocks):
        # time mixing: ht[t', c] = gelu(sum_t wt[t', t] * h[t, c] + bt[t'])
        # (time-mix weight is stored output-major, so no transpose is needed)
        ht = jnp.dot(wt_ref[i], h.astype(bf16), preferred_element_type=f32)
        ht = jax.nn.gelu(ht + bt_ref[i], approximate=True)
        h = h + ht
        # channel mixing
        hc = jnp.dot(h.astype(bf16), wc_ref[i], preferred_element_type=f32)
        h = h + jax.nn.gelu(hc + bc_ref[i], approximate=True)

    # ---- attention logits (att2 folded into a lane reduction) --------------
    ah = jnp.dot(h.astype(bf16), wa1_ref[...], preferred_element_type=f32)
    ah = jnp.tanh(ah + ba1_ref[...])                             # [T, A]
    logits = jnp.sum(ah * wa2_ref[...], axis=-1, keepdims=True)  # [T, 1]
    # (att2 bias is a constant shift -> softmax-invariant, omitted)

    # ---- attentive statistics pooling (softmax over T) ---------------------
    logits = logits - jnp.max(logits, axis=0, keepdims=True)
    w = jnp.exp(logits)
    w = w / jnp.sum(w, axis=0, keepdims=True)                    # [T, 1]
    mu = jnp.sum(w * h, axis=0, keepdims=True)                   # [1, C]
    diff = h - mu
    var = jnp.sum(w * diff * diff, axis=0, keepdims=True)        # stable form
    sigma = jnp.sqrt(jnp.maximum(var, 1e-6))
    pooled = jnp.concatenate([mu, sigma], axis=-1)               # [1, 2C]

    # ---- embedding head (lane-padded output, sliced to 192 outside) --------
    emb = jnp.dot(pooled.astype(bf16), wemb_ref[...], preferred_element_type=f32)
    emb = emb + bemb_ref[...]                                    # [1, EMB_PAD]
    o_ref[...] = emb.reshape(o_ref.shape).astype(o_ref.dtype)


# ---------------------------------------------------------------------------
# Synthetic ReDimNet-style parameters (deterministic)
# ---------------------------------------------------------------------------
def init_params(key, n_frames):
    ks = list(jax.random.split(key, 8 + 2 * N_BLOCKS))

    def dense(k, fan_in, fan_out):
        scale = 1.0 / jnp.sqrt(jnp.float32(fan_in))
        w = (jax.random.normal(k, (fan_in, fan_out), jnp.float32) * scale)
        b = jnp.zeros((1, fan_out), jnp.float32)
        return w, b

    params = {}

    w_fb, b_fb = dense(ks[0], WIN, F_MEL)
    params["w_fb"], params["b_fb"] = w_fb.astype(jnp.bfloat16), b_fb

    w_st, b_st = dense(ks[1], F_MEL, C_DIM)
    params["w_stem"], params["b_stem"] = w_st.astype(jnp.bfloat16), b_st

    T = n_frames
    w_t_list, w_c_list = [], []
    for i in range(N_BLOCKS):
        w_t, _ = dense(ks[2 + 2 * i], T, T)        # stored output-major [T_out, T_in]
        w_c, _ = dense(ks[3 + 2 * i], C_DIM, C_DIM)
        w_t_list.append(w_t.astype(jnp.bfloat16))
        w_c_list.append(w_c.astype(jnp.bfloat16))
    params["w_t"] = jnp.stack(w_t_list, axis=0)                     # [NB, T, T]
    params["b_t"] = jnp.zeros((N_BLOCKS, T, 1), jnp.float32)        # [NB, T, 1]
    params["w_c"] = jnp.stack(w_c_list, axis=0)                     # [NB, C, C]
    params["b_c"] = jnp.zeros((N_BLOCKS, 1, C_DIM), jnp.float32)    # [NB, 1, C]

    w_a1, b_a1 = dense(ks[2 + 2 * N_BLOCKS], C_DIM, ATT_HID)
    params["w_att1"], params["b_att1"] = w_a1.astype(jnp.bfloat16), b_a1
    w_a2, _ = dense(ks[3 + 2 * N_BLOCKS], ATT_HID, 1)
    params["w_att2"] = w_a2.reshape(1, ATT_HID).astype(jnp.float32)  # row vector

    w_e, b_e = dense(ks[4 + 2 * N_BLOCKS], 2 * C_DIM, EMB_PAD)
    # zero the padded columns so only EMB_DIM real dims carry signal
    col_mask = (jnp.arange(EMB_PAD) < EMB_DIM).astype(jnp.float32)
    params["w_emb"] = (w_e * col_mask[None, :]).astype(jnp.bfloat16)
    params["b_emb"] = b_e
    return params


# ---------------------------------------------------------------------------
# Forward pass: one fused pallas_call, grid over batch ("parallel")
# ---------------------------------------------------------------------------
@jax.jit
def redimnet_forward(params, audios):
    """audios: [B, L] float32 raw waveform -> embeddings [B, EMB_DIM]."""
    B, L = audios.shape
    T = (L - WIN) // HOP + 1
    n_chunks = T + 1
    # zero-copy view of the waveform as contiguous HOP-sized chunks
    chunks = audios[:, : n_chunks * HOP].reshape(B, n_chunks, HOP)

    def full2(a):
        return pl.BlockSpec(a.shape, lambda b: (0, 0))

    def full3(a):
        return pl.BlockSpec(a.shape, lambda b: (0, 0, 0))

    in_specs = [
        pl.BlockSpec((1, n_chunks, HOP), lambda b: (b, 0, 0)),   # audio chunks
        full2(params["w_fb"]), full2(params["b_fb"]),
        full2(params["w_stem"]), full2(params["b_stem"]),
        full3(params["w_t"]), full3(params["b_t"]),
        full3(params["w_c"]), full3(params["b_c"]),
        full2(params["w_att1"]), full2(params["b_att1"]),
        full2(params["w_att2"]),
        full2(params["w_emb"]), full2(params["b_emb"]),
    ]

    out = pl.pallas_call(
        _redimnet_fused_kernel,
        out_shape=jax.ShapeDtypeStruct((B, 1, EMB_PAD), jnp.float32),
        grid=(B,),
        in_specs=in_specs,
        out_specs=pl.BlockSpec((1, 1, EMB_PAD), lambda b: (b, 0, 0)),
        compiler_params=pltpu.CompilerParams(
            dimension_semantics=("parallel",)),
    )(chunks, params["w_fb"], params["b_fb"],
      params["w_stem"], params["b_stem"],
      params["w_t"], params["b_t"], params["w_c"], params["b_c"],
      params["w_att1"], params["b_att1"], params["w_att2"],
      params["w_emb"], params["b_emb"])

    return out[:, 0, :EMB_DIM]


def compute_similarities(e_i, e_j):
    """Mirror of ReDimNet.compute_similarities (cosine similarity * 100).

    Matches the original helper's semantics (valid for 1-D embeddings)."""
    num = jnp.dot(e_i, e_j.T)
    den = jnp.linalg.norm(e_i) * jnp.linalg.norm(e_j)
    return num / den * 100.0


# ---------------------------------------------------------------------------
if __name__ == "__main__":
    key = jax.random.PRNGKey(0)
    k_audio, k_params = jax.random.split(key)

    B = 2
    L = WIN + 15 * HOP            # -> 16 frames
    audios = jax.random.normal(k_audio, (B, L), jnp.float32)

    n_frames = (L - WIN) // HOP + 1
    params = init_params(k_params, n_frames)

    emb = redimnet_forward(params, audios)
    emb = jax.block_until_ready(emb)
    assert emb.shape == (B, EMB_DIM)
    assert bool(jnp.all(jnp.isfinite(emb)))

    # sanity: cosine-similarity helper works on the produced embeddings
    sim = jax.block_until_ready(compute_similarities(emb[0], emb[1]))
    assert bool(jnp.isfinite(sim))

    print("KERNEL_OK")
</pallas_src>

<mosaic_0001>
module attributes {stable_mosaic.version = 11 : i64} {
  func.func @_redimnet_fused_kernel(%arg0: i32, %arg1: memref<1x17x128xf32, #tpu.memory_space<vmem>>, %arg2: memref<256x128xbf16, #tpu.memory_space<vmem>>, %arg3: memref<1x128xf32, #tpu.memory_space<vmem>>, %arg4: memref<128x128xbf16, #tpu.memory_space<vmem>>, %arg5: memref<1x128xf32, #tpu.memory_space<vmem>>, %arg6: memref<2x16x16xbf16, #tpu.memory_space<vmem>>, %arg7: memref<2x16x1xf32, #tpu.memory_space<vmem>>, %arg8: memref<2x128x128xbf16, #tpu.memory_space<vmem>>, %arg9: memref<2x1x128xf32, #tpu.memory_space<vmem>>, %arg10: memref<128x128xbf16, #tpu.memory_space<vmem>>, %arg11: memref<1x128xf32, #tpu.memory_space<vmem>>, %arg12: memref<1x128xf32, #tpu.memory_space<vmem>>, %arg13: memref<256x256xbf16, #tpu.memory_space<vmem>>, %arg14: memref<1x256xf32, #tpu.memory_space<vmem>>, %arg15: memref<1x1x256xf32, #tpu.memory_space<vmem>>) attributes {dimension_semantics = [#tpu.dimension_semantics<parallel>], iteration_bounds = array<i64: 2>, scalar_prefetch = 0 : i64, scratch_operands = 0 : i64, tpu.core_type = #tpu.core_type<tc>, window_params = [{transform_indices = @transform_0, window_bounds = array<i64: 1, 17, 128>}, {pipeline_mode = #tpu.pipeline_mode<synchronous>, transform_indices = @transform_1, window_bounds = array<i64: 256, 128>}, {pipeline_mode = #tpu.pipeline_mode<synchronous>, transform_indices = @transform_2, window_bounds = array<i64: 1, 128>}, {pipeline_mode = #tpu.pipeline_mode<synchronous>, transform_indices = @transform_3, window_bounds = array<i64: 128, 128>}, {pipeline_mode = #tpu.pipeline_mode<synchronous>, transform_indices = @transform_4, window_bounds = array<i64: 1, 128>}, {pipeline_mode = #tpu.pipeline_mode<synchronous>, transform_indices = @transform_5, window_bounds = array<i64: 2, 16, 16>}, {pipeline_mode = #tpu.pipeline_mode<synchronous>, transform_indices = @transform_6, window_bounds = array<i64: 2, 16, 1>}, {pipeline_mode = #tpu.pipeline_mode<synchronous>, transform_indices = @transform_7, window_bounds = array<i64: 2, 128, 128>}, {pipeline_mode = #tpu.pipeline_mode<synchronous>, transform_indices = @transform_8, window_bounds = array<i64: 2, 1, 128>}, {pipeline_mode = #tpu.pipeline_mode<synchronous>, transform_indices = @transform_9, window_bounds = array<i64: 128, 128>}, {pipeline_mode = #tpu.pipeline_mode<synchronous>, transform_indices = @transform_10, window_bounds = array<i64: 1, 128>}, {pipeline_mode = #tpu.pipeline_mode<synchronous>, transform_indices = @transform_11, window_bounds = array<i64: 1, 128>}, {pipeline_mode = #tpu.pipeline_mode<synchronous>, transform_indices = @transform_12, window_bounds = array<i64: 256, 256>}, {pipeline_mode = #tpu.pipeline_mode<synchronous>, transform_indices = @transform_13, window_bounds = array<i64: 1, 256>}, {transform_indices = @transform_14, window_bounds = array<i64: 1, 1, 256>}]} {
    %c0 = arith.constant 0 : index
    %c0_0 = arith.constant 0 : index
    %c0_1 = arith.constant 0 : index
    %0 = vector.load %arg1[%c0, %c0_0, %c0_1] : memref<1x17x128xf32, #tpu.memory_space<vmem>>, vector<1x16x128xf32>
    %1 = vector.shape_cast %0 : vector<1x16x128xf32> to vector<16x128xf32>
    %c0_2 = arith.constant 0 : index
    %c1 = arith.constant 1 : index
    %c0_3 = arith.constant 0 : index
    %2 = vector.load %arg1[%c0_2, %c1, %c0_3] : memref<1x17x128xf32, #tpu.memory_space<vmem>>, vector<1x16x128xf32>
    %3 = vector.shape_cast %2 : vector<1x16x128xf32> to vector<16x128xf32>
    %4 = tpu.concatenate %1, %3 in 1 : vector<16x128xf32>, vector<16x128xf32> -> vector<16x256xf32>
    %5 = arith.truncf %4 : vector<16x256xf32> to vector<16x256xbf16>
    %c0_4 = arith.constant 0 : index
    %c0_5 = arith.constant 0 : index
    %6 = vector.load %arg2[%c0_4, %c0_5] : memref<256x128xbf16, #tpu.memory_space<vmem>>, vector<256x128xbf16>
    %cst = arith.constant dense<0.000000e+00> : vector<16x128xf32>
    %7 = tpu.matmul %5, %6, %cst {dimension_numbers = #tpu.dot_dimension_numbers<[1], [0], [0], [1], [0, 0, 1, 1], [], []>} : vector<16x256xbf16>, vector<256x128xbf16>, vector<16x128xf32> -> vector<16x128xf32>
    %c0_6 = arith.constant 0 : index
    %c0_7 = arith.constant 0 : index
    %8 = vector.load %arg3[%c0_6, %c0_7] : memref<1x128xf32, #tpu.memory_space<vmem>>, vector<1x128xf32>
    %9 = vector.broadcast %8 : vector<1x128xf32> to vector<16x128xf32>
    %10 = arith.addf %7, %9 : vector<16x128xf32>
    %cst_8 = arith.constant 0.000000e+00 : f32
    %11 = vector.broadcast %cst_8 : f32 to vector<16x128xf32>
    %12 = arith.maximumf %10, %11 : vector<16x128xf32>
    %cst_9 = arith.constant 1.000000e+00 : f32
    %13 = vector.broadcast %cst_9 : f32 to vector<16x128xf32>
    %14 = arith.addf %12, %13 : vector<16x128xf32>
    %15 = math.log %14 : vector<16x128xf32>
    %16 = arith.truncf %15 : vector<16x128xf32> to vector<16x128xbf16>
    %c0_10 = arith.constant 0 : index
    %c0_11 = arith.constant 0 : index
    %17 = vector.load %arg4[%c0_10, %c0_11] : memref<128x128xbf16, #tpu.memory_space<vmem>>, vector<128x128xbf16>
    %cst_12 = arith.constant dense<0.000000e+00> : vector<16x128xf32>
    %18 = tpu.matmul %16, %17, %cst_12 {dimension_numbers = #tpu.dot_dimension_numbers<[1], [0], [0], [1], [0, 0, 1, 1], [], []>} : vector<16x128xbf16>, vector<128x128xbf16>, vector<16x128xf32> -> vector<16x128xf32>
    %c0_13 = arith.constant 0 : index
    %c0_14 = arith.constant 0 : index
    %19 = vector.load %arg5[%c0_13, %c0_14] : memref<1x128xf32, #tpu.memory_space<vmem>>, vector<1x128xf32>
    %20 = vector.broadcast %19 : vector<1x128xf32> to vector<16x128xf32>
    %21 = arith.addf %18, %20 : vector<16x128xf32>
    %22 = arith.mulf %21, %21 : vector<16x128xf32>
    %23 = arith.mulf %21, %22 : vector<16x128xf32>
    %cst_15 = arith.constant 4.471500e-02 : f32
    %24 = vector.broadcast %cst_15 : f32 to vector<16x128xf32>
    %25 = arith.mulf %24, %23 : vector<16x128xf32>
    %26 = arith.addf %21, %25 : vector<16x128xf32>
    %cst_16 = arith.constant 0.797884583 : f32
    %27 = vector.broadcast %cst_16 : f32 to vector<16x128xf32>
    %28 = arith.mulf %27, %26 : vector<16x128xf32>
    %29 = math.tanh %28 : vector<16x128xf32>
    %cst_17 = arith.constant 1.000000e+00 : f32
    %30 = vector.broadcast %cst_17 : f32 to vector<16x128xf32>
    %31 = arith.addf %30, %29 : vector<16x128xf32>
    %cst_18 = arith.constant 5.000000e-01 : f32
    %32 = vector.broadcast %cst_18 : f32 to vector<16x128xf32>
    %33 = arith.mulf %32, %31 : vector<16x128xf32>
    %34 = arith.mulf %21, %33 : vector<16x128xf32>
    %c0_19 = arith.constant 0 : index
    %c0_20 = arith.constant 0 : index
    %c0_21 = arith.constant 0 : index
    %35 = vector.load %arg6[%c0_19, %c0_20, %c0_21] : memref<2x16x16xbf16, #tpu.memory_space<vmem>>, vector<1x16x16xbf16>
    %36 = vector.shape_cast %35 : vector<1x16x16xbf16> to vector<16x16xbf16>
    %37 = arith.truncf %34 : vector<16x128xf32> to vector<16x128xbf16>
    %cst_22 = arith.constant dense<0.000000e+00> : vector<16x128xf32>
    %38 = tpu.matmul %36, %37, %cst_22 {dimension_numbers = #tpu.dot_dimension_numbers<[1], [0], [0], [1], [0, 0, 1, 1], [], []>} : vector<16x16xbf16>, vector<16x128xbf16>, vector<16x128xf32> -> vector<16x128xf32>
    %c0_23 = arith.constant 0 : index
    %c0_24 = arith.constant 0 : index
    %c0_25 = arith.constant 0 : index
    %39 = vector.load %arg7[%c0_23, %c0_24, %c0_25] : memref<2x16x1xf32, #tpu.memory_space<vmem>>, vector<1x16x1xf32>
    %40 = vector.shape_cast %39 : vector<1x16x1xf32> to vector<16x1xf32>
    %41 = vector.broadcast %40 : vector<16x1xf32> to vector<16x128xf32>
    %42 = arith.addf %38, %41 : vector<16x128xf32>
    %43 = arith.mulf %42, %42 : vector<16x128xf32>
    %44 = arith.mulf %42, %43 : vector<16x128xf32>
    %cst_26 = arith.constant 4.471500e-02 : f32
    %45 = vector.broadcast %cst_26 : f32 to vector<16x128xf32>
    %46 = arith.mulf %45, %44 : vector<16x128xf32>
    %47 = arith.addf %42, %46 : vector<16x128xf32>
    %cst_27 = arith.constant 0.797884583 : f32
    %48 = vector.broadcast %cst_27 : f32 to vector<16x128xf32>
    %49 = arith.mulf %48, %47 : vector<16x128xf32>
    %50 = math.tanh %49 : vector<16x128xf32>
    %cst_28 = arith.constant 1.000000e+00 : f32
    %51 = vector.broadcast %cst_28 : f32 to vector<16x128xf32>
    %52 = arith.addf %51, %50 : vector<16x128xf32>
    %cst_29 = arith.constant 5.000000e-01 : f32
    %53 = vector.broadcast %cst_29 : f32 to vector<16x128xf32>
    %54 = arith.mulf %53, %52 : vector<16x128xf32>
    %55 = arith.mulf %42, %54 : vector<16x128xf32>
    %56 = arith.addf %34, %55 : vector<16x128xf32>
    %57 = arith.truncf %56 : vector<16x128xf32> to vector<16x128xbf16>
    %c0_30 = arith.constant 0 : index
    %c0_31 = arith.constant 0 : index
    %c0_32 = arith.constant 0 : index
    %58 = vector.load %arg8[%c0_30, %c0_31, %c0_32] : memref<2x128x128xbf16, #tpu.memory_space<vmem>>, vector<1x128x128xbf16>
    %59 = vector.shape_cast %58 : vector<1x128x128xbf16> to vector<128x128xbf16>
    %cst_33 = arith.constant dense<0.000000e+00> : vector<16x128xf32>
    %60 = tpu.matmul %57, %59, %cst_33 {dimension_numbers = #tpu.dot_dimension_numbers<[1], [0], [0], [1], [0, 0, 1, 1], [], []>} : vector<16x128xbf16>, vector<128x128xbf16>, vector<16x128xf32> -> vector<16x128xf32>
    %c0_34 = arith.constant 0 : index
    %c0_35 = arith.constant 0 : index
    %c0_36 = arith.constant 0 : index
    %61 = vector.load %arg9[%c0_34, %c0_35, %c0_36] : memref<2x1x128xf32, #tpu.memory_space<vmem>>, vector<1x1x128xf32>
    %62 = vector.shape_cast %61 : vector<1x1x128xf32> to vector<1x128xf32>
    %63 = vector.broadcast %62 : vector<1x128xf32> to vector<16x128xf32>
    %64 = arith.addf %60, %63 : vector<16x128xf32>
    %65 = arith.mulf %64, %64 : vector<16x128xf32>
    %66 = arith.mulf %64, %65 : vector<16x128xf32>
    %cst_37 = arith.constant 4.471500e-02 : f32
    %67 = vector.broadcast %cst_37 : f32 to vector<16x128xf32>
    %68 = arith.mulf %67, %66 : vector<16x128xf32>
    %69 = arith.addf %64, %68 : vector<16x128xf32>
    %cst_38 = arith.constant 0.797884583 : f32
    %70 = vector.broadcast %cst_38 : f32 to vector<16x128xf32>
    %71 = arith.mulf %70, %69 : vector<16x128xf32>
    %72 = math.tanh %71 : vector<16x128xf32>
    %cst_39 = arith.constant 1.000000e+00 : f32
    %73 = vector.broadcast %cst_39 : f32 to vector<16x128xf32>
    %74 = arith.addf %73, %72 : vector<16x128xf32>
    %cst_40 = arith.constant 5.000000e-01 : f32
    %75 = vector.broadcast %cst_40 : f32 to vector<16x128xf32>
    %76 = arith.mulf %75, %74 : vector<16x128xf32>
    %77 = arith.mulf %64, %76 : vector<16x128xf32>
    %78 = arith.addf %56, %77 : vector<16x128xf32>
    %c1_41 = arith.constant 1 : index
    %c0_42 = arith.constant 0 : index
    %c0_43 = arith.constant 0 : index
    %79 = vector.load %arg6[%c1_41, %c0_42, %c0_43] : memref<2x16x16xbf16, #tpu.memory_space<vmem>>, vector<1x16x16xbf16>
    %80 = vector.shape_cast %79 : vector<1x16x16xbf16> to vector<16x16xbf16>
    %81 = arith.truncf %78 : vector<16x128xf32> to vector<16x128xbf16>
    %cst_44 = arith.constant dense<0.000000e+00> : vector<16x128xf32>
    %82 = tpu.matmul %80, %81, %cst_44 {dimension_numbers = #tpu.dot_dimension_numbers<[1], [0], [0], [1], [0, 0, 1, 1], [], []>} : vector<16x16xbf16>, vector<16x128xbf16>, vector<16x128xf32> -> vector<16x128xf32>
    %c1_45 = arith.constant 1 : index
    %c0_46 = arith.constant 0 : index
    %c0_47 = arith.constant 0 : index
    %83 = vector.load %arg7[%c1_45, %c0_46, %c0_47] : memref<2x16x1xf32, #tpu.memory_space<vmem>>, vector<1x16x1xf32>
    %84 = vector.shape_cast %83 : vector<1x16x1xf32> to vector<16x1xf32>
    %85 = vector.broadcast %84 : vector<16x1xf32> to vector<16x128xf32>
    %86 = arith.addf %82, %85 : vector<16x128xf32>
    %87 = arith.mulf %86, %86 : vector<16x128xf32>
    %88 = arith.mulf %86, %87 : vector<16x128xf32>
    %cst_48 = arith.constant 4.471500e-02 : f32
    %89 = vector.broadcast %cst_48 : f32 to vector<16x128xf32>
    %90 = arith.mulf %89, %88 : vector<16x128xf32>
    %91 = arith.addf %86, %90 : vector<16x128xf32>
    %cst_49 = arith.constant 0.797884583 : f32
    %92 = vector.broadcast %cst_49 : f32 to vector<16x128xf32>
    %93 = arith.mulf %92, %91 : vector<16x128xf32>
    %94 = math.tanh %93 : vector<16x128xf32>
    %cst_50 = arith.constant 1.000000e+00 : f32
    %95 = vector.broadcast %cst_50 : f32 to vector<16x128xf32>
    %96 = arith.addf %95, %94 : vector<16x128xf32>
    %cst_51 = arith.constant 5.000000e-01 : f32
    %97 = vector.broadcast %cst_51 : f32 to vector<16x128xf32>
    %98 = arith.mulf %97, %96 : vector<16x128xf32>
    %99 = arith.mulf %86, %98 : vector<16x128xf32>
    %100 = arith.addf %78, %99 : vector<16x128xf32>
    %101 = arith.truncf %100 : vector<16x128xf32> to vector<16x128xbf16>
    %c1_52 = arith.constant 1 : index
    %c0_53 = arith.constant 0 : index
    %c0_54 = arith.constant 0 : index
    %102 = vector.load %arg8[%c1_52, %c0_53, %c0_54] : memref<2x128x128xbf16, #tpu.memory_space<vmem>>, vector<1x128x128xbf16>
    %103 = vector.shape_cast %102 : vector<1x128x128xbf16> to vector<128x128xbf16>
    %cst_55 = arith.constant dense<0.000000e+00> : vector<16x128xf32>
    %104 = tpu.matmul %101, %103, %cst_55 {dimension_numbers = #tpu.dot_dimension_numbers<[1], [0], [0], [1], [0, 0, 1, 1], [], []>} : vector<16x128xbf16>, vector<128x128xbf16>, vector<16x128xf32> -> vector<16x128xf32>
    %c1_56 = arith.constant 1 : index
    %c0_57 = arith.constant 0 : index
    %c0_58 = arith.constant 0 : index
    %105 = vector.load %arg9[%c1_56, %c0_57, %c0_58] : memref<2x1x128xf32, #tpu.memory_space<vmem>>, vector<1x1x128xf32>
    %106 = vector.shape_cast %105 : vector<1x1x128xf32> to vector<1x128xf32>
    %107 = vector.broadcast %106 : vector<1x128xf32> to vector<16x128xf32>
    %108 = arith.addf %104, %107 : vector<16x128xf32>
    %109 = arith.mulf %108, %108 : vector<16x128xf32>
    %110 = arith.mulf %108, %109 : vector<16x128xf32>
    %cst_59 = arith.constant 4.471500e-02 : f32
    %111 = vector.broadcast %cst_59 : f32 to vector<16x128xf32>
    %112 = arith.mulf %111, %110 : vector<16x128xf32>
    %113 = arith.addf %108, %112 : vector<16x128xf32>
    %cst_60 = arith.constant 0.797884583 : f32
    %114 = vector.broadcast %cst_60 : f32 to vector<16x128xf32>
    %115 = arith.mulf %114, %113 : vector<16x128xf32>
    %116 = math.tanh %115 : vector<16x128xf32>
    %cst_61 = arith.constant 1.000000e+00 : f32
    %117 = vector.broadcast %cst_61 : f32 to vector<16x128xf32>
    %118 = arith.addf %117, %116 : vector<16x128xf32>
    %cst_62 = arith.constant 5.000000e-01 : f32
    %119 = vector.broadcast %cst_62 : f32 to vector<16x128xf32>
    %120 = arith.mulf %119, %118 : vector<16x128xf32>
    %121 = arith.mulf %108, %120 : vector<16x128xf32>
    %122 = arith.addf %100, %121 : vector<16x128xf32>
    %123 = arith.truncf %122 : vector<16x128xf32> to vector<16x128xbf16>
    %c0_63 = arith.constant 0 : index
    %c0_64 = arith.constant 0 : index
    %124 = vector.load %arg10[%c0_63, %c0_64] : memref<128x128xbf16, #tpu.memory_space<vmem>>, vector<128x128xbf16>
    %cst_65 = arith.constant dense<0.000000e+00> : vector<16x128xf32>
    %125 = tpu.matmul %123, %124, %cst_65 {dimension_numbers = #tpu.dot_dimension_numbers<[1], [0], [0], [1], [0, 0, 1, 1], [], []>} : vector<16x128xbf16>, vector<128x128xbf16>, vector<16x128xf32> -> vector<16x128xf32>
    %c0_66 = arith.constant 0 : index
    %c0_67 = arith.constant 0 : index
    %126 = vector.load %arg11[%c0_66, %c0_67] : memref<1x128xf32, #tpu.memory_space<vmem>>, vector<1x128xf32>
    %127 = vector.broadcast %126 : vector<1x128xf32> to vector<16x128xf32>
    %128 = arith.addf %125, %127 : vector<16x128xf32>
    %129 = math.tanh %128 : vector<16x128xf32>
    %c0_68 = arith.constant 0 : index
    %c0_69 = arith.constant 0 : index
    %130 = vector.load %arg12[%c0_68, %c0_69] : memref<1x128xf32, #tpu.memory_space<vmem>>, vector<1x128xf32>
    %131 = vector.broadcast %130 : vector<1x128xf32> to vector<16x128xf32>
    %132 = arith.mulf %129, %131 : vector<16x128xf32>
    %cst_70 = arith.constant dense<0.000000e+00> : vector<16xf32>
    %133 = vector.multi_reduction <add>, %132, %cst_70 [1] : vector<16x128xf32> to vector<16xf32>
    %134 = vector.shape_cast %133 : vector<16xf32> to vector<16x1xf32>
    %cst_71 = arith.constant dense<0xFF800000> : vector<1xf32>
    %135 = vector.multi_reduction <maximumf>, %134, %cst_71 [0] : vector<16x1xf32> to vector<1xf32>
    %136 = vector.shape_cast %135 : vector<1xf32> to vector<1x1xf32>
    %137 = vector.broadcast %136 : vector<1x1xf32> to vector<16x1xf32>
    %138 = arith.subf %134, %137 : vector<16x1xf32>
    %139 = math.exp %138 : vector<16x1xf32>
    %cst_72 = arith.constant dense<0.000000e+00> : vector<1xf32>
    %140 = vector.multi_reduction <add>, %139, %cst_72 [0] : vector<16x1xf32> to vector<1xf32>
    %141 = vector.shape_cast %140 : vector<1xf32> to vector<1x1xf32>
    %142 = vector.broadcast %141 : vector<1x1xf32> to vector<16x1xf32>
    %143 = arith.divf %139, %142 : vector<16x1xf32>
    %144 = vector.broadcast %143 : vector<16x1xf32> to vector<16x128xf32>
    %145 = arith.mulf %144, %122 : vector<16x128xf32>
    %cst_73 = arith.constant dense<0.000000e+00> : vector<128xf32>
    %146 = vector.multi_reduction <add>, %145, %cst_73 [0] : vector<16x128xf32> to vector<128xf32>
    %147 = vector.shape_cast %146 : vector<128xf32> to vector<1x128xf32>
    %148 = vector.broadcast %147 : vector<1x128xf32> to vector<16x128xf32>
    %149 = arith.subf %122, %148 : vector<16x128xf32>
    %150 = vector.broadcast %143 : vector<16x1xf32> to vector<16x128xf32>
    %151 = arith.mulf %150, %149 : vector<16x128xf32>
    %152 = arith.mulf %151, %149 : vector<16x128xf32>
    %cst_74 = arith.constant dense<0.000000e+00> : vector<128xf32>
    %153 = vector.multi_reduction <add>, %152, %cst_74 [0] : vector<16x128xf32> to vector<128xf32>
    %154 = vector.shape_cast %153 : vector<128xf32> to vector<1x128xf32>
    %cst_75 = arith.constant 9.99999997E-7 : f32
    %155 = vector.broadcast %cst_75 : f32 to vector<1x128xf32>
    %156 = arith.maximumf %154, %155 : vector<1x128xf32>
    %157 = math.sqrt %156 : vector<1x128xf32>
    %158 = tpu.concatenate %147, %157 in 1 : vector<1x128xf32>, vector<1x128xf32> -> vector<1x256xf32>
    %159 = arith.truncf %158 : vector<1x256xf32> to vector<1x256xbf16>
    %c0_76 = arith.constant 0 : index
    %c0_77 = arith.constant 0 : index
    %160 = vector.load %arg13[%c0_76, %c0_77] : memref<256x256xbf16, #tpu.memory_space<vmem>>, vector<256x256xbf16>
    %cst_78 = arith.constant dense<0.000000e+00> : vector<1x256xf32>
    %161 = tpu.matmul %159, %160, %cst_78 {dimension_numbers = #tpu.dot_dimension_numbers<[1], [0], [0], [1], [0, 0, 1, 1], [], []>} : vector<1x256xbf16>, vector<256x256xbf16>, vector<1x256xf32> -> vector<1x256xf32>
    %c0_79 = arith.constant 0 : index
    %c0_80 = arith.constant 0 : index
    %162 = vector.load %arg14[%c0_79, %c0_80] : memref<1x256xf32, #tpu.memory_space<vmem>>, vector<1x256xf32>
    %163 = arith.addf %161, %162 : vector<1x256xf32>
    %164 = vector.shape_cast %163 : vector<1x256xf32> to vector<1x1x256xf32>
    %c0_81 = arith.constant 0 : index
    %c0_82 = arith.constant 0 : index
    %c0_83 = arith.constant 0 : index
    %165 = vector.load %arg15[%c0_81, %c0_82, %c0_83] : memref<1x1x256xf32, #tpu.memory_space<vmem>>, vector<1x1x256xf32>
    tpu.vector_store %arg15[%c0_81, %c0_82, %c0_83], %164 {strides = array<i32>} : memref<1x1x256xf32, #tpu.memory_space<vmem>>, vector<1x1x256xf32>,
    return
  }
  func.func @transform_0(%arg0: i32) -> (i32, i32, i32) {
    %c0_i32 = arith.constant 0 : i32
    %c0_i32_0 = arith.constant 0 : i32
    %c0_i32_1 = arith.constant 0 : i32
    return %arg0, %c0_i32, %c0_i32_0 : i32, i32, i32
  }
  func.func @transform_1(%arg0: i32) -> (i32, i32) {
    %c0_i32 = arith.constant 0 : i32
    %c0_i32_0 = arith.constant 0 : i32
    %c0_i32_1 = arith.constant 0 : i32
    return %c0_i32, %c0_i32_0 : i32, i32
  }
  func.func @transform_2(%arg0: i32) -> (i32, i32) {
    %c0_i32 = arith.constant 0 : i32
    %c0_i32_0 = arith.constant 0 : i32
    %c0_i32_1 = arith.constant 0 : i32
    return %c0_i32, %c0_i32_0 : i32, i32
  }
  func.func @transform_3(%arg0: i32) -> (i32, i32) {
    %c0_i32 = arith.constant 0 : i32
    %c0_i32_0 = arith.constant 0 : i32
    %c0_i32_1 = arith.constant 0 : i32
    return %c0_i32, %c0_i32_0 : i32, i32
  }
  func.func @transform_4(%arg0: i32) -> (i32, i32) {
    %c0_i32 = arith.constant 0 : i32
    %c0_i32_0 = arith.constant 0 : i32
    %c0_i32_1 = arith.constant 0 : i32
    return %c0_i32, %c0_i32_0 : i32, i32
  }
  func.func @transform_5(%arg0: i32) -> (i32, i32, i32) {
    %c0_i32 = arith.constant 0 : i32
    %c0_i32_0 = arith.constant 0 : i32
    %c0_i32_1 = arith.constant 0 : i32
    %c0_i32_2 = arith.constant 0 : i32
    return %c0_i32, %c0_i32_0, %c0_i32_1 : i32, i32, i32
  }
  func.func @transform_6(%arg0: i32) -> (i32, i32, i32) {
    %c0_i32 = arith.constant 0 : i32
    %c0_i32_0 = arith.constant 0 : i32
    %c0_i32_1 = arith.constant 0 : i32
    %c0_i32_2 = arith.constant 0 : i32
    return %c0_i32, %c0_i32_0, %c0_i32_1 : i32, i32, i32
  }
  func.func @transform_7(%arg0: i32) -> (i32, i32, i32) {
    %c0_i32 = arith.constant 0 : i32
    %c0_i32_0 = arith.constant 0 : i32
    %c0_i32_1 = arith.constant 0 : i32
    %c0_i32_2 = arith.constant 0 : i32
    return %c0_i32, %c0_i32_0, %c0_i32_1 : i32, i32, i32
  }
  func.func @transform_8(%arg0: i32) -> (i32, i32, i32) {
    %c0_i32 = arith.constant 0 : i32
    %c0_i32_0 = arith.constant 0 : i32
    %c0_i32_1 = arith.constant 0 : i32
    %c0_i32_2 = arith.constant 0 : i32
    return %c0_i32, %c0_i32_0, %c0_i32_1 : i32, i32, i32
  }
  func.func @transform_9(%arg0: i32) -> (i32, i32) {
    %c0_i32 = arith.constant 0 : i32
    %c0_i32_0 = arith.constant 0 : i32
    %c0_i32_1 = arith.constant 0 : i32
    return %c0_i32, %c0_i32_0 : i32, i32
  }
  func.func @transform_10(%arg0: i32) -> (i32, i32) {
    %c0_i32 = arith.constant 0 : i32
    %c0_i32_0 = arith.constant 0 : i32
    %c0_i32_1 = arith.constant 0 : i32
    return %c0_i32, %c0_i32_0 : i32, i32
  }
  func.func @transform_11(%arg0: i32) -> (i32, i32) {
    %c0_i32 = arith.constant 0 : i32
    %c0_i32_0 = arith.constant 0 : i32
    %c0_i32_1 = arith.constant 0 : i32
    return %c0_i32, %c0_i32_0 : i32, i32
  }
  func.func @transform_12(%arg0: i32) -> (i32, i32) {
    %c0_i32 = arith.constant 0 : i32
    %c0_i32_0 = arith.constant 0 : i32
    %c0_i32_1 = arith.constant 0 : i32
    return %c0_i32, %c0_i32_0 : i32, i32
  }
  func.func @transform_13(%arg0: i32) -> (i32, i32) {
    %c0_i32 = arith.constant 0 : i32
    %c0_i32_0 = arith.constant 0 : i32
    %c0_i32_1 = arith.constant 0 : i32
    return %c0_i32, %c0_i32_0 : i32, i32
  }
  func.func @transform_14(%arg0: i32) -> (i32, i32, i32) {
    %c0_i32 = arith.constant 0 : i32
    %c0_i32_0 = arith.constant 0 : i32
    %c0_i32_1 = arith.constant 0 : i32
    return %arg0, %c0_i32, %c0_i32_0 : i32, i32, i32
  }
}

</mosaic_0001>

<llo_original>
// kernel: redimnet_forward.1
$region0: #{redimnet_forward.1}
  #allocation0 [shape = 'u32[]', space=smem, size = 0x4, offset = 0x4, fixed_abs, tag = 'smem constant byte address 0x4 - core index']
  #allocation1 [shape = 'u32[144,128]{1,0:T(1,128)}', space=vmem, size = 0x12000, scoped, tag = 'internal scratch']
  %s0 = inlined_call_operand.vmem [shape: f32[2,17,128], index: 0, kind: input, shape index: {}]
  %s1 = inlined_call_operand.vmem [shape: bf16[256,128], index: 1, kind: input, shape index: {}]
  %s2 = inlined_call_operand.vmem [shape: f32[1,128], index: 2, kind: input, shape index: {}]
  %s3 = inlined_call_operand.hbm [shape: bf16[128,128], index: 3, kind: input, shape index: {}]
  %s4 = inlined_call_operand.hbm [shape: f32[1,128], index: 4, kind: input, shape index: {}]
  %s5 = inlined_call_operand.hbm [shape: bf16[2,16,16], index: 5, kind: input, shape index: {}]
  %s6 = inlined_call_operand.vmem [shape: f32[2,16,1], index: 6, kind: input, shape index: {}]
  %s7 = inlined_call_operand.hbm [shape: bf16[2,128,128], index: 7, kind: input, shape index: {}]
  %s8 = inlined_call_operand.vmem [shape: f32[2,1,128], index: 8, kind: input, shape index: {}]
  %s9 = inlined_call_operand.hbm [shape: bf16[128,128], index: 9, kind: input, shape index: {}]
  %s10 = inlined_call_operand.hbm [shape: f32[1,128], index: 10, kind: input, shape index: {}]
  %s11 = inlined_call_operand.hbm [shape: f32[1,128], index: 11, kind: input, shape index: {}]
  %s12 = inlined_call_operand.hbm [shape: bf16[256,256], index: 12, kind: input, shape index: {}]
  %s13 = inlined_call_operand.hbm [shape: f32[1,256], index: 13, kind: input, shape index: {}]
  %s14 = inlined_call_operand.vmem [shape: f32[2,1,256], index: 14, kind: output, shape index: {}]
  %s15 = sld [smem:[#allocation0]]
  $region125: #{redimnet_forward.1} parent=0
    _
  %s17 = ssub.s32 1, %s15
  %s18 = scalar_select 0, %s17, %s15
  $region1: #{redimnet_forward.1} parent=0
    #allocation2 [shape = 'u8[32768]{0}', space=vmem, size = 0x8000, scoped, tag = 'input window, operand 3, single buffered']
    #allocation3 [shape = 's32[2]{0}', space=sflag, size = 0x8, scoped, tag = 'scoped memory for redimnet_forward.1']
    #allocation4 [shape = 'u8[512]{0}', space=vmem, size = 0x400, scoped, tag = 'input window, operand 4, single buffered']
    #allocation5 [shape = 's32[1]{0}', space=sflag, size = 0x4, scoped, tag = 'scoped memory for redimnet_forward.1']
    #allocation6 [shape = 'u8[8192]{0}', space=vmem, size = 0x2000, scoped, tag = 'input window, operand 5, single buffered']
    #allocation7 [shape = 'u8[65536]{0}', space=vmem, size = 0x10000, scoped, tag = 'input window, operand 7, single buffered']
    #allocation8 [shape = 's32[1]{0}', space=sflag, size = 0x4, scoped, tag = 'scoped memory for redimnet_forward.1']
    #allocation9 [shape = 'u8[32768]{0}', space=vmem, size = 0x8000, scoped, tag = 'input window, operand 9, single buffered']
    #allocation10 [shape = 'u8[512]{0}', space=vmem, size = 0x400, scoped, tag = 'input window, operand 10, single buffered']
    #allocation11 [shape = 's32[1]{0}', space=sflag, size = 0x4, scoped, tag = 'scoped memory for redimnet_forward.1']
    #allocation12 [shape = 'u8[512]{0}', space=vmem, size = 0x400, scoped, tag = 'input window, operand 11, single buffered']
    #allocation13 [shape = 'u8[131072]{0}', space=vmem, size = 0x20000, scoped, tag = 'input window, operand 12, single buffered']
    #allocation14 [shape = 's32[1]{0}', space=sflag, size = 0x4, scoped, tag = 'scoped memory for redimnet_forward.1']
    #allocation15 [shape = 'u8[1024]{0}', space=vmem, size = 0x400, scoped, tag = 'input window, operand 13, single buffered']
    %19 = vsyncpa [#allocation3], 0
    %20 = vsyncpa [#allocation5], 0
    %21 = vsyncpa [#allocation8], 0
    %22 = vsyncpa [#allocation11], 0
    %23 = vsyncpa [#allocation14], 0
    loop: start=0, step=1, limit=4
    $region2: #{redimnet_forward.1} parent=1 // loop_pre_header
      _
    $region3: #{redimnet_forward.1} parent=1 // loop_header
      %s25 = sphi 0, %s29
      %p26 = scmp.ge.s32.totalorder %s25, 4
      %s35 = sphi 0, %s37
      %s38 = sphi 0, %s35
      %s39 = sphi 0, %s38
      %s55 = sphi 0, %s39
      %s59 = sphi 0, %s59
      %s61 = sphi 0, %s59
      %s62 = sphi 0, %s61
      %s76 = sphi 0, %s62
      %s80 = sphi 0, %s80
      %s82 = sphi 0, %s80
      %s83 = sphi 0, %s82
      %s97 = sphi 0, %s83
      %s101 = sphi 0, %s101
      %s103 = sphi 0, %s101
      %s104 = sphi 0, %s103
      %s118 = sphi 0, %s104
      %s122 = sphi 0, %s122
      %s124 = sphi 0, %s122
      %s125 = sphi 0, %s124
      %s139 = sphi 0, %s125
      %s143 = sphi 0, %s143
      %s145 = sphi 0, %s143
      %s146 = sphi 0, %s145
      %s160 = sphi 0, %s146
      %s164 = sphi 0, %s164
      %s166 = sphi 0, %s164
      %s167 = sphi 0, %s166
      %s181 = sphi 0, %s167
      %s185 = sphi 0, %s185
      %s187 = sphi 0, %s185
      %s188 = sphi 0, %s187
      %s202 = sphi 0, %s188
      %s206 = sphi 0, %s206
      %s208 = sphi 0, %s206
      %s209 = sphi 0, %s208
      %s223 = sphi 0, %s209
      %s227 = sphi 0, %s227
      %s229 = sphi 0, %s227
      %s230 = sphi 0, %s229
      %s244 = sphi 0, %s230
      %s248 = sphi 0, %s248
      %s250 = sphi 0, %s248
      %s251 = sphi 0, %s250
      %s265 = sphi 0, %s251
      %s269 = sphi 0, %s269
      %s271 = sphi 0, %s269
      %s272 = sphi 0, %s271
      %s286 = sphi 0, %s272
      %s290 = sphi 0, %s290
      %s292 = sphi 0, %s290
      %s293 = sphi 0, %s292
      %s307 = sphi 0, %s293
      %s311 = sphi 0, %s311
      %s313 = sphi 0, %s311
      %s314 = sphi 0, %s313
      %s328 = sphi 0, %s314
      %s334 = sphi 0, %s336
      %s337 = sphi 0, %s334
      %s338 = sphi 0, %s337
      %s354 = sphi 0, %s338
    $region4: #{redimnet_forward.1} parent=1 // loop_header_branch
      %28 = sbr.rel (%p26) target = $region8
    $region5: #{redimnet_forward.1} parent=1 // loop_body
      %s30 = ssub.s32 %s25, 1
      %s31 = ssub.s32 %s25, 2
      %s32 = sadd.s32 %s25, 1
      %s33 = ssub.s32 %s25, %s32
      %p34 = scmp.eq.s32.totalorder %s33, 0
      %s36 = sadd.s32 %s35, 1
      %s37 = scalar_select %p34, %s35, %s36
      %p40 = pneg %p34
      %p41 = scmp.eq.s32.totalorder %s25, 1
      %p42 = por %p40, %p41
      %p43 = scmp.ne.s32.totalorder %s35, %s38
      %p44 = scmp.eq.s32.totalorder %s25, 0
      %p45 = por %p43, %p44
      %p46 = scmp.ne.s32.totalorder %s35, %s38
      %p47 = scmp.eq.s32.totalorder %s30, 1
      %p48 = por %p46, %p47
      %p49 = scmp.ne.s32.totalorder %s38, %s39
      %p50 = scmp.eq.s32.totalorder %s30, 0
      %p51 = por %p49, %p50
      %p52 = scmp.ne.s32.totalorder %s38, %s39
      %p53 = scmp.eq.s32.totalorder %s31, 1
      %p54 = por %p52, %p53
      %p56 = scmp.ne.s32.totalorder %s39, %s55
      %p57 = scmp.eq.s32.totalorder %s31, 0
      %p58 = por %p56, %p57
      %s60 = sadd.s32 %s59, 1
      %p63 = scmp.eq.s32.totalorder %s25, 1
      %p64 = scmp.ne.s32.totalorder %s59, %s61
      %p65 = scmp.eq.s32.totalorder %s25, 0
      %p66 = por %p64, %p65
      %p67 = scmp.ne.s32.totalorder %s59, %s61
      %p68 = scmp.eq.s32.totalorder %s30, 1
      %p69 = por %p67, %p68
      %p70 = scmp.ne.s32.totalorder %s61, %s62
      %p71 = scmp.eq.s32.totalorder %s30, 0
      %p72 = por %p70, %p71
      %p73 = scmp.ne.s32.totalorder %s61, %s62
      %p74 = scmp.eq.s32.totalorder %s31, 1
      %p75 = por %p73, %p74
      %p77 = scmp.ne.s32.totalorder %s62, %s76
      %p78 = scmp.eq.s32.totalorder %s31, 0
      %p79 = por %p77, %p78
      %s81 = sadd.s32 %s80, 1
      %p84 = scmp.eq.s32.totalorder %s25, 1
      %p85 = scmp.ne.s32.totalorder %s80, %s82
      %p86 = scmp.eq.s32.totalorder %s25, 0
      %p87 = por %p85, %p86
      %p88 = scmp.ne.s32.totalorder %s80, %s82
      %p89 = scmp.eq.s32.totalorder %s30, 1
      %p90 = por %p88, %p89
      %p91 = scmp.ne.s32.totalorder %s82, %s83
      %p92 = scmp.eq.s32.totalorder %s30, 0
      %p93 = por %p91, %p92
      %p94 = scmp.ne.s32.totalorder %s82, %s83
      %p95 = scmp.eq.s32.totalorder %s31, 1
      %p96 = por %p94, %p95
      %p98 = scmp.ne.s32.totalorder %s83, %s97
      %p99 = scmp.eq.s32.totalorder %s31, 0
      %p100 = por %p98, %p99
      %s102 = sadd.s32 %s101, 1
      %p105 = scmp.eq.s32.totalorder %s25, 1
      %p106 = scmp.ne.s32.totalorder %s101, %s103
      %p107 = scmp.eq.s32.totalorder %s25, 0
      %p108 = por %p106, %p107
      %p109 = scmp.ne.s32.totalorder %s101, %s103
      %p110 = scmp.eq.s32.totalorder %s30, 1
      %p111 = por %p109, %p110
      %p112 = scmp.ne.s32.totalorder %s103, %s104
      %p113 = scmp.eq.s32.totalorder %s30, 0
      %p114 = por %p112, %p113
      %p115 = scmp.ne.s32.totalorder %s103, %s104
      %p116 = scmp.eq.s32.totalorder %s31, 1
      %p117 = por %p115, %p116
      %p119 = scmp.ne.s32.totalorder %s104, %s118
      %p120 = scmp.eq.s32.totalorder %s31, 0
      %p121 = por %p119, %p120
      %s123 = sadd.s32 %s122, 1
      %p126 = scmp.eq.s32.totalorder %s25, 1
      %p127 = scmp.ne.s32.totalorder %s122, %s124
      %p128 = scmp.eq.s32.totalorder %s25, 0
      %p129 = por %p127, %p128
      %p130 = scmp.ne.s32.totalorder %s122, %s124
      %p131 = scmp.eq.s32.totalorder %s30, 1
      %p132 = por %p130, %p131
      %p133 = scmp.ne.s32.totalorder %s124, %s125
      %p134 = scmp.eq.s32.totalorder %s30, 0
      %p135 = por %p133, %p134
      %p136 = scmp.ne.s32.totalorder %s124, %s125
      %p137 = scmp.eq.s32.totalorder %s31, 1
      %p138 = por %p136, %p137
      %p140 = scmp.ne.s32.totalorder %s125, %s139
      %p141 = scmp.eq.s32.totalorder %s31, 0
      %p142 = por %p140, %p141
      %s144 = sadd.s32 %s143, 1
      %p147 = scmp.eq.s32.totalorder %s25, 1
      %p148 = scmp.ne.s32.totalorder %s143, %s145
      %p149 = scmp.eq.s32.totalorder %s25, 0
      %p150 = por %p148, %p149
      %p151 = scmp.ne.s32.totalorder %s143, %s145
      %p152 = scmp.eq.s32.totalorder %s30, 1
      %p153 = por %p151, %p152
      %p154 = scmp.ne.s32.totalorder %s145, %s146
      %p155 = scmp.eq.s32.totalorder %s30, 0
      %p156 = por %p154, %p155
      %p157 = scmp.ne.s32.totalorder %s145, %s146
      %p158 = scmp.eq.s32.totalorder %s31, 1
      %p159 = por %p157, %p158
      %p161 = scmp.ne.s32.totalorder %s146, %s160
      %p162 = scmp.eq.s32.totalorder %s31, 0
      %p163 = por %p161, %p162
      %s165 = sadd.s32 %s164, 1
      %p168 = scmp.eq.s32.totalorder %s25, 1
      %p169 = scmp.ne.s32.totalorder %s164, %s166
      %p170 = scmp.eq.s32.totalorder %s25, 0
      %p171 = por %p169, %p170
      %p172 = scmp.ne.s32.totalorder %s164, %s166
      %p173 = scmp.eq.s32.totalorder %s30, 1
      %p174 = por %p172, %p173
      %p175 = scmp.ne.s32.totalorder %s166, %s167
      %p176 = scmp.eq.s32.totalorder %s30, 0
      %p177 = por %p175, %p176
      %p178 = scmp.ne.s32.totalorder %s166, %s167
      %p179 = scmp.eq.s32.totalorder %s31, 1
      %p180 = por %p178, %p179
      %p182 = scmp.ne.s32.totalorder %s167, %s181
      %p183 = scmp.eq.s32.totalorder %s31, 0
      %p184 = por %p182, %p183
      %s186 = sadd.s32 %s185, 1
      %p189 = scmp.eq.s32.totalorder %s25, 1
      %p190 = scmp.ne.s32.totalorder %s185, %s187
      %p191 = scmp.eq.s32.totalorder %s25, 0
      %p192 = por %p190, %p191
      %p193 = scmp.ne.s32.totalorder %s185, %s187
      %p194 = scmp.eq.s32.totalorder %s30, 1
      %p195 = por %p193, %p194
      %p196 = scmp.ne.s32.totalorder %s187, %s188
      %p197 = scmp.eq.s32.totalorder %s30, 0
      %p198 = por %p196, %p197
      %p199 = scmp.ne.s32.totalorder %s187, %s188
      %p200 = scmp.eq.s32.totalorder %s31, 1
      %p201 = por %p199, %p200
      %p203 = scmp.ne.s32.totalorder %s188, %s202
      %p204 = scmp.eq.s32.totalorder %s31, 0
      %p205 = por %p203, %p204
      %s207 = sadd.s32 %s206, 1
      %p210 = scmp.eq.s32.totalorder %s25, 1
      %p211 = scmp.ne.s32.totalorder %s206, %s208
      %p212 = scmp.eq.s32.totalorder %s25, 0
      %p213 = por %p211, %p212
      %p214 = scmp.ne.s32.totalorder %s206, %s208
      %p215 = scmp.eq.s32.totalorder %s30, 1
      %p216 = por %p214, %p215
      %p217 = scmp.ne.s32.totalorder %s208, %s209
      %p218 = scmp.eq.s32.totalorder %s30, 0
      %p219 = por %p217, %p218
      %p220 = scmp.ne.s32.totalorder %s208, %s209
      %p221 = scmp.eq.s32.totalorder %s31, 1
      %p222 = por %p220, %p221
      %p224 = scmp.ne.s32.totalorder %s209, %s223
      %p225 = scmp.eq.s32.totalorder %s31, 0
      %p226 = por %p224, %p225
      %s228 = sadd.s32 %s227, 1
      %p231 = scmp.eq.s32.totalorder %s25, 1
      %p232 = scmp.ne.s32.totalorder %s227, %s229
      %p233 = scmp.eq.s32.totalorder %s25, 0
      %p234 = por %p232, %p233
      %p235 = scmp.ne.s32.totalorder %s227, %s229
      %p236 = scmp.eq.s32.totalorder %s30, 1
      %p237 = por %p235, %p236
      %p238 = scmp.ne.s32.totalorder %s229, %s230
      %p239 = scmp.eq.s32.totalorder %s30, 0
      %p240 = por %p238, %p239
      %p241 = scmp.ne.s32.totalorder %s229, %s230
      %p242 = scmp.eq.s32.totalorder %s31, 1
      %p243 = por %p241, %p242
      %p245 = scmp.ne.s32.totalorder %s230, %s244
      %p246 = scmp.eq.s32.totalorder %s31, 0
      %p247 = por %p245, %p246
      %s249 = sadd.s32 %s248, 1
      %p252 = scmp.eq.s32.totalorder %s25, 1
      %p253 = scmp.ne.s32.totalorder %s248, %s250
      %p254 = scmp.eq.s32.totalorder %s25, 0
      %p255 = por %p253, %p254
      %p256 = scmp.ne.s32.totalorder %s248, %s250
      %p257 = scmp.eq.s32.totalorder %s30, 1
      %p258 = por %p256, %p257
      %p259 = scmp.ne.s32.totalorder %s250, %s251
      %p260 = scmp.eq.s32.totalorder %s30, 0
      %p261 = por %p259, %p260
      %p262 = scmp.ne.s32.totalorder %s250, %s251
      %p263 = scmp.eq.s32.totalorder %s31, 1
      %p264 = por %p262, %p263
      %p266 = scmp.ne.s32.totalorder %s251, %s265
      %p267 = scmp.eq.s32.totalorder %s31, 0
      %p268 = por %p266, %p267
      %s270 = sadd.s32 %s269, 1
      %p273 = scmp.eq.s32.totalorder %s25, 1
      %p274 = scmp.ne.s32.totalorder %s269, %s271
      %p275 = scmp.eq.s32.totalorder %s25, 0
      %p276 = por %p274, %p275
      %p277 = scmp.ne.s32.totalorder %s269, %s271
      %p278 = scmp.eq.s32.totalorder %s30, 1
      %p279 = por %p277, %p278
      %p280 = scmp.ne.s32.totalorder %s271, %s272
      %p281 = scmp.eq.s32.totalorder %s30, 0
      %p282 = por %p280, %p281
      %p283 = scmp.ne.s32.totalorder %s271, %s272
      %p284 = scmp.eq.s32.totalorder %s31, 1
      %p285 = por %p283, %p284
      %p287 = scmp.ne.s32.totalorder %s272, %s286
      %p288 = scmp.eq.s32.totalorder %s31, 0
      %p289 = por %p287, %p288
      %s291 = sadd.s32 %s290, 1
      %p294 = scmp.eq.s32.totalorder %s25, 1
      %p295 = scmp.ne.s32.totalorder %s290, %s292
      %p296 = scmp.eq.s32.totalorder %s25, 0
      %p297 = por %p295, %p296
      %p298 = scmp.ne.s32.totalorder %s290, %s292
      %p299 = scmp.eq.s32.totalorder %s30, 1
      %p300 = por %p298, %p299
      %p301 = scmp.ne.s32.totalorder %s292, %s293
      %p302 = scmp.eq.s32.totalorder %s30, 0
      %p303 = por %p301, %p302
      %p304 = scmp.ne.s32.totalorder %s292, %s293
      %p305 = scmp.eq.s32.totalorder %s31, 1
      %p306 = por %p304, %p305
      %p308 = scmp.ne.s32.totalorder %s293, %s307
      %p309 = scmp.eq.s32.totalorder %s31, 0
      %p310 = por %p308, %p309
      %s312 = sadd.s32 %s311, 1
      %p315 = scmp.eq.s32.totalorder %s25, 1
      %p316 = scmp.ne.s32.totalorder %s311, %s313
      %p317 = scmp.eq.s32.totalorder %s25, 0
      %p318 = por %p316, %p317
      %p319 = scmp.ne.s32.totalorder %s311, %s313
      %p320 = scmp.eq.s32.totalorder %s30, 1
      %p321 = por %p319, %p320
      %p322 = scmp.ne.s32.totalorder %s313, %s314
      %p323 = scmp.eq.s32.totalorder %s30, 0
      %p324 = por %p322, %p323
      %p325 = scmp.ne.s32.totalorder %s313, %s314
      %p326 = scmp.eq.s32.totalorder %s31, 1
      %p327 = por %p325, %p326
      %p329 = scmp.ne.s32.totalorder %s314, %s328
      %p330 = scmp.eq.s32.totalorder %s31, 0
      %p331 = por %p329, %p330
      %s332 = ssub.s32 %s25, %s32
      %p333 = scmp.eq.s32.totalorder %s332, 0
      %s335 = sadd.s32 %s334, 1
      %s336 = scalar_select %p333, %s334, %s335
      %p339 = pneg %p333
      %p340 = scmp.eq.s32.totalorder %s25, 1
      %p341 = por %p339, %p340
      %p342 = scmp.ne.s32.totalorder %s334, %s337
      %p343 = scmp.eq.s32.totalorder %s25, 0
      %p344 = por %p342, %p343
      %p345 = scmp.ne.s32.totalorder %s334, %s337
      %p346 = scmp.eq.s32.totalorder %s30, 1
      %p347 = por %p345, %p346
      %p348 = scmp.ne.s32.totalorder %s337, %s338
      %p349 = scmp.eq.s32.totalorder %s30, 0
      %p350 = por %p348, %p349
      %p351 = scmp.ne.s32.totalorder %s337, %s338
      %p352 = scmp.eq.s32.totalorder %s31, 1
      %p353 = por %p351, %p352
      %p355 = scmp.ne.s32.totalorder %s338, %s354
      %p356 = scmp.eq.s32.totalorder %s31, 0
      %p357 = por %p355, %p356
      %p358 = scmp.le.s32.totalorder 1, %s25
      %p359 = scmp.lt.s32.totalorder %s25, 3
      %p360 = pnand %p358, %p359
      %p361 = pneg %p360
      // Predicated region
      $region9: #{redimnet_forward.1} parent=5 // pred_check
        _
      $region10: #{redimnet_forward.1} parent=5 // pred_check_branch
        %363 = sbr.rel (%p360) target = $region12
      $region11: #{redimnet_forward.1} parent=5 // pred_region
        %s364 = ssub.s32 %s25, 1
        // Predicated region
        $region13: #{redimnet_forward.1} parent=11 // pred_check
          %p365 = pneg %p72
        $region14: #{redimnet_forward.1} parent=11 // pred_check_branch
          %367 = sbr.rel (%p365) target = $region16
        $region15: #{redimnet_forward.1} parent=11 // pred_region
          _
        $region16: #{redimnet_forward.1} parent=11 // pred_fallthru
          _
        // Predicated region
        $region17: #{redimnet_forward.1} parent=11 // pred_check
          %p368 = pneg %p93
        $region18: #{redimnet_forward.1} parent=11 // pred_check_branch
          %370 = sbr.rel (%p368) target = $region20
        $region19: #{redimnet_forward.1} parent=11 // pred_region
          _
        $region20: #{redimnet_forward.1} parent=11 // pred_fallthru
          _
        // Predicated region
        $region21: #{redimnet_forward.1} parent=11 // pred_check
          %p371 = pneg %p114
        $region22: #{redimnet_forward.1} parent=11 // pred_check_branch
          %373 = sbr.rel (%p371) target = $region24
        $region23: #{redimnet_forward.1} parent=11 // pred_region
          %s375 = ssub.s32 1024, 1024
          %376 = vsyncadd [#allocation3], %s375
          %s377 = sshll.u32 [#allocation2], 4
          %s378 = int_to_ptr.vmem [resolvable:$true] %s377
          %383 = dma.hbm_to_vmem [thread:$0]  %s3, 1024, %s378, [#allocation3], 64, 64, 4
        $region24: #{redimnet_forward.1} parent=11 // pred_fallthru
          _
        // Predicated region
        $region25: #{redimnet_forward.1} parent=11 // pred_check
          %p384 = pneg %p135
        $region26: #{redimnet_forward.1} parent=11 // pred_check_branch
          %386 = sbr.rel (%p384) target = $region28
        $region27: #{redimnet_forward.1} parent=11 // pred_region
          %s388 = ssub.s32 16, 16
          %389 = vsyncadd [#allocation5], %s388
          %s391 = sshll.u32 [#allocation4], 4
          %s392 = int_to_ptr.vmem [resolvable:$true] %s391
          %394 = dma.hbm_to_vmem [thread:$0]  %s4, 16, %s392, [#allocation5]
        $region28: #{redimnet_forward.1} parent=11 // pred_fallthru
          _
        // Predicated region
        $region29: #{redimnet_forward.1} parent=11 // pred_check
          %p395 = pneg %p156
        $region30: #{redimnet_forward.1} parent=11 // pred_check_branch
          %397 = sbr.rel (%p395) target = $region32
        $region31: #{redimnet_forward.1} parent=11 // pred_region
          %s399 = ssub.s32 256, 256
          %400 = vsyncadd [#allocation5], %s399
          %s401 = sshll.u32 [#allocation6], 4
          %s402 = int_to_ptr.vmem [resolvable:$true] %s401
          %407 = dma.hbm_to_vmem [thread:$0]  %s5, 256, %s402, [#allocation5], 64, 64, 4
        $region32: #{redimnet_forward.1} parent=11 // pred_fallthru
          _
        // Predicated region
        $region33: #{redimnet_forward.1} parent=11 // pred_check
          %p408 = pneg %p177
        $region34: #{redimnet_forward.1} parent=11 // pred_check_branch
          %410 = sbr.rel (%p408) target = $region36
        $region35: #{redimnet_forward.1} parent=11 // pred_region
          _
        $region36: #{redimnet_forward.1} parent=11 // pred_fallthru
          _
        // Predicated region
        $region37: #{redimnet_forward.1} parent=11 // pred_check
          %p411 = pneg %p198
        $region38: #{redimnet_forward.1} parent=11 // pred_check_branch
          %413 = sbr.rel (%p411) target = $region40
        $region39: #{redimnet_forward.1} parent=11 // pred_region
          %s415 = ssub.s32 2048, 2048
          %416 = vsyncadd [#allocation8], %s415
          %s417 = sshll.u32 [#allocation7], 4
          %s418 = int_to_ptr.vmem [resolvable:$true] %s417
          %423 = dma.hbm_to_vmem [thread:$0]  %s7, 2048, %s418, [#allocation8], 64, 64, 4
        $region40: #{redimnet_forward.1} parent=11 // pred_fallthru
          _
        // Predicated region
        $region41: #{redimnet_forward.1} parent=11 // pred_check
          %p424 = pneg %p219
        $region42: #{redimnet_forward.1} parent=11 // pred_check_branch
          %426 = sbr.rel (%p424) target = $region44
        $region43: #{redimnet_forward.1} parent=11 // pred_region
          _
        $region44: #{redimnet_forward.1} parent=11 // pred_fallthru
          _
        // Predicated region
        $region45: #{redimnet_forward.1} parent=11 // pred_check
          %p427 = pneg %p240
        $region46: #{redimnet_forward.1} parent=11 // pred_check_branch
          %429 = sbr.rel (%p427) target = $region48
        $region47: #{redimnet_forward.1} parent=11 // pred_region
          %s431 = ssub.s32 1024, 1024
          %432 = vsyncadd [#allocation8], %s431
          %s433 = sshll.u32 [#allocation9], 4
          %s434 = int_to_ptr.vmem [resolvable:$true] %s433
          %439 = dma.hbm_to_vmem [thread:$0]  %s9, 1024, %s434, [#allocation8], 64, 64, 4
        $region48: #{redimnet_forward.1} parent=11 // pred_fallthru
          _
        // Predicated region
        $region49: #{redimnet_forward.1} parent=11 // pred_check
          %p440 = pneg %p261
        $region50: #{redimnet_forward.1} parent=11 // pred_check_branch
          %442 = sbr.rel (%p440) target = $region52
        $region51: #{redimnet_forward.1} parent=11 // pred_region
          %s444 = ssub.s32 16, 16
          %445 = vsyncadd [#allocation11], %s444
          %s447 = sshll.u32 [#allocation10], 4
          %s448 = int_to_ptr.vmem [resolvable:$true] %s447
          %450 = dma.hbm_to_vmem [thread:$0]  %s10, 16, %s448, [#allocation11]
        $region52: #{redimnet_forward.1} parent=11 // pred_fallthru
          _
        // Predicated region
        $region53: #{redimnet_forward.1} parent=11 // pred_check
          %p451 = pneg %p282
        $region54: #{redimnet_forward.1} parent=11 // pred_check_branch
          %453 = sbr.rel (%p451) target = $region56
        $region55: #{redimnet_forward.1} parent=11 // pred_region
          %s455 = ssub.s32 16, 16
          %456 = vsyncadd [#allocation11], %s455
          %s458 = sshll.u32 [#allocation12], 4
          %s459 = int_to_ptr.vmem [resolvable:$true] %s458
          %461 = dma.hbm_to_vmem [thread:$0]  %s11, 16, %s459, [#allocation11]
        $region56: #{redimnet_forward.1} parent=11 // pred_fallthru
          _
        // Predicated region
        $region57: #{redimnet_forward.1} parent=11 // pred_check
          %p462 = pneg %p303
        $region58: #{redimnet_forward.1} parent=11 // pred_check_branch
          %464 = sbr.rel (%p462) target = $region60
        $region59: #{redimnet_forward.1} parent=11 // pred_region
          %s466 = ssub.s32 4096, 4096
          %467 = vsyncadd [#allocation14], %s466
          %s468 = sshll.u32 [#allocation13], 4
          %s469 = int_to_ptr.vmem [resolvable:$true] %s468
          %474 = dma.hbm_to_vmem [thread:$0]  %s12, 4096, %s469, [#allocation14], 128, 128, 8
        $region60: #{redimnet_forward.1} parent=11 // pred_fallthru
          _
        // Predicated region
        $region61: #{redimnet_forward.1} parent=11 // pred_check
          %p475 = pneg %p324
        $region62: #{redimnet_forward.1} parent=11 // pred_check_branch
          %477 = sbr.rel (%p475) target = $region64
        $region63: #{redimnet_forward.1} parent=11 // pred_region
          %s479 = ssub.s32 32, 32
          %480 = vsyncadd [#allocation14], %s479
          %s482 = sshll.u32 [#allocation15], 4
          %s483 = int_to_ptr.vmem [resolvable:$true] %s482
          %485 = dma.hbm_to_vmem [thread:$0]  %s13, 32, %s483, [#allocation14]
        $region64: #{redimnet_forward.1} parent=11 // pred_fallthru
          _
      $region12: #{redimnet_forward.1} parent=5 // pred_fallthru
        _
      %p486 = scmp.lt.s32.totalorder %s25, 2
      // Predicated region
      $region65: #{redimnet_forward.1} parent=5 // pred_check
        %p487 = pneg %p486
      $region66: #{redimnet_forward.1} parent=5 // pred_check_branch
        %489 = sbr.rel (%p487) target = $region68
      $region67: #{redimnet_forward.1} parent=5 // pred_region
        // Predicated region
        $region69: #{redimnet_forward.1} parent=67 // pred_check
          %p490 = pneg %p45
        $region70: #{redimnet_forward.1} parent=67 // pred_check_branch
          %492 = sbr.rel (%p490) target = $region72
        $region71: #{redimnet_forward.1} parent=67 // pred_region
          %p493 = scmp.lt.s32.totalorder %s25, 1
          %s494 = scalar_select %p493, %s25, 1
          %s495 = smul.addr %s494, 3
          %s496 = smul.addr %s495, 8
          %s497 = scalar_lea.vmem %s0, %s496
        $region72: #{redimnet_forward.1} parent=67 // pred_fallthru
          _
      $region68: #{redimnet_forward.1} parent=5 // pred_fallthru
        _
      %p498 = scmp.le.s32.totalorder 1, %s25
      %p499 = scmp.lt.s32.totalorder %s25, 3
      %p500 = pnand %p498, %p499
      %p501 = pneg %p500
      // Predicated region
      $region73: #{redimnet_forward.1} parent=5 // pred_check
        _
      $region74: #{redimnet_forward.1} parent=5 // pred_check_branch
        %503 = sbr.rel (%p500) target = $region76
      $region75: #{redimnet_forward.1} parent=5 // pred_region
        %s504 = ssub.s32 %s25, 1
        // Predicated region
        $region77: #{redimnet_forward.1} parent=75 // pred_check
          %p505 = pneg %p114
        $region78: #{redimnet_forward.1} parent=75 // pred_check_branch
          %507 = sbr.rel (%p505) target = $region80
        $region79: #{redimnet_forward.1} parent=75 // pred_region
          %508 = dma.done [#allocation3], 1024
        $region80: #{redimnet_forward.1} parent=75 // pred_fallthru
          _
        // Predicated region
        $region81: #{redimnet_forward.1} parent=75 // pred_check
          %p509 = pneg %p135
        $region82: #{redimnet_forward.1} parent=75 // pred_check_branch
          %511 = sbr.rel (%p509) target = $region84
        $region83: #{redimnet_forward.1} parent=75 // pred_region
          %512 = dma.done [#allocation5], 16
        $region84: #{redimnet_forward.1} parent=75 // pred_fallthru
          _
        // Predicated region
        $region85: #{redimnet_forward.1} parent=75 // pred_check
          %p513 = pneg %p156
        $region86: #{redimnet_forward.1} parent=75 // pred_check_branch
          %515 = sbr.rel (%p513) target = $region88
        $region87: #{redimnet_forward.1} parent=75 // pred_region
          %516 = dma.done [#allocation5], 256
        $region88: #{redimnet_forward.1} parent=75 // pred_fallthru
          _
        // Predicated region
        $region89: #{redimnet_forward.1} parent=75 // pred_check
          %p517 = pneg %p198
        $region90: #{redimnet_forward.1} parent=75 // pred_check_branch
          %519 = sbr.rel (%p517) target = $region92
        $region91: #{redimnet_forward.1} parent=75 // pred_region
          %520 = dma.done [#allocation8], 2048
        $region92: #{redimnet_forward.1} parent=75 // pred_fallthru
          _
        // Predicated region
        $region93: #{redimnet_forward.1} parent=75 // pred_check
          %p521 = pneg %p240
        $region94: #{redimnet_forward.1} parent=75 // pred_check_branch
          %523 = sbr.rel (%p521) target = $region96
        $region95: #{redimnet_forward.1} parent=75 // pred_region
          %524 = dma.done [#allocation8], 1024
        $region96: #{redimnet_forward.1} parent=75 // pred_fallthru
          _
        // Predicated region
        $region97: #{redimnet_forward.1} parent=75 // pred_check
          %p525 = pneg %p261
        $region98: #{redimnet_forward.1} parent=75 // pred_check_branch
          %527 = sbr.rel (%p525) target = $region100
        $region99: #{redimnet_forward.1} parent=75 // pred_region
          %528 = dma.done [#allocation11], 16
        $region100: #{redimnet_forward.1} parent=75 // pred_fallthru
          _
        // Predicated region
        $region101: #{redimnet_forward.1} parent=75 // pred_check
          %p529 = pneg %p282
        $region102: #{redimnet_forward.1} parent=75 // pred_check_branch
          %531 = sbr.rel (%p529) target = $region104
        $region103: #{redimnet_forward.1} parent=75 // pred_region
          %532 = dma.done [#allocation11], 16
        $region104: #{redimnet_forward.1} parent=75 // pred_fallthru
          _
        // Predicated region
        $region105: #{redimnet_forward.1} parent=75 // pred_check
          %p533 = pneg %p303
        $region106: #{redimnet_forward.1} parent=75 // pred_check_branch
          %535 = sbr.rel (%p533) target = $region108
        $region107: #{redimnet_forward.1} parent=75 // pred_region
          %536 = dma.done [#allocation14], 4096
        $region108: #{redimnet_forward.1} parent=75 // pred_fallthru
          _
        // Predicated region
        $region109: #{redimnet_forward.1} parent=75 // pred_check
          %p537 = pneg %p324
        $region110: #{redimnet_forward.1} parent=75 // pred_check_branch
          %539 = sbr.rel (%p537) target = $region112
        $region111: #{redimnet_forward.1} parent=75 // pred_region
          %540 = dma.done [#allocation14], 32
        $region112: #{redimnet_forward.1} parent=75 // pred_fallthru
          _
        %p541 = scmp.lt.s32.totalorder %s30, 1
        %s542 = scalar_select %p541, %s30, 1
        %s543 = smul.addr %s542, 3
        %s544 = smul.addr %s543, 8
        %s545 = scalar_lea.vmem %s0, %s544
        %p546 = pneg %p51
        %p547 = pneg %p48
        %p548 = pneg %p72
        %p549 = pneg %p69
        %p550 = pneg %p93
        %p551 = pneg %p90
        %p552 = pneg %p114
        %p553 = pneg %p111
        %p554 = pneg %p135
        %p555 = pneg %p132
        %p556 = pneg %p156
        %p557 = pneg %p153
        %p558 = pneg %p177
        %p559 = pneg %p174
        %p560 = pneg %p198
        %p561 = pneg %p195
        %p562 = pneg %p219
        %p563 = pneg %p216
        %p564 = pneg %p240
        %p565 = pneg %p237
        %p566 = pneg %p261
        %p567 = pneg %p258
        %p568 = pneg %p282
        %p569 = pneg %p279
        %p570 = pneg %p303
        %p571 = pneg %p300
        %p572 = pneg %p324
        %p573 = pneg %p321
        %p574 = pneg %p350
        %p575 = pneg %p347
        %p576 = scmp.lt.s32.totalorder %s30, 1
        %s577 = scalar_select %p576, %s30, 1
        %s578 = smul.addr %s577, 2
        %s579 = scalar_lea.vmem %s14, %s578
        %p580 = scmp.lt.s32.totalorder %s30, 1
        %s581 = scalar_select %p580, %s30, 1
        %s582 = smul.addr %s581, 3
        %s583 = smul.addr %s582, 8
        %s584 = scalar_lea.vmem %s0, %s583
        %p585 = scmp.lt.s32.totalorder %s30, 1
        %s586 = scalar_select %p585, %s30, 1
        %s587 = smul.addr %s586, 2
        %s588 = scalar_lea.vmem %s14, %s587
        %v590 = vld [vmem:[%s584] sm:$0xff]
        %v591 = vld [vmem:[%s584 + $0x8] sm:$0xff]
        %v592 = vld [vmem:[%s584 + $0x1] sm:$0xff]
        %v593 = vld [vmem:[%s584 + $0x9] sm:$0xff]
        %v594 = vpack.c.bf16 %v591, %v590
        %v595 = vpack.c.bf16 %v593, %v592
        %v596 = vld [vmem:[%s1] sm:$0xf]
        %v597 = vld [vmem:[%s1 + $0x4] sm:$0xf]
        %v598 = vld [vmem:[%s1 + $0x8] sm:$0xf]
        %v599 = vld [vmem:[%s1 + $0xc] sm:$0xf]
        %v600 = vld [vmem:[%s1 + $0x10] sm:$0xf]
        %v601 = vld [vmem:[%s1 + $0x14] sm:$0xf]
        %v602 = vld [vmem:[%s1 + $0x18] sm:$0xf]
        %v603 = vld [vmem:[%s1 + $0x1c] sm:$0xf]
        %v604 = vld [vmem:[%s1 + $0x20] sm:$0xf]
        %v605 = vld [vmem:[%s1 + $0x24] sm:$0xf]
        %v606 = vld [vmem:[%s1 + $0x28] sm:$0xf]
        %v607 = vld [vmem:[%s1 + $0x2c] sm:$0xf]
        %v608 = vld [vmem:[%s1 + $0x30] sm:$0xf]
        %v609 = vld [vmem:[%s1 + $0x34] sm:$0xf]
        %v610 = vld [vmem:[%s1 + $0x38] sm:$0xf]
        %v611 = vld [vmem:[%s1 + $0x3c] sm:$0xf]
        %v612 = vld [vmem:[%s1 + $0x40] sm:$0xf]
        %v613 = vld [vmem:[%s1 + $0x44] sm:$0xf]
        %v614 = vld [vmem:[%s1 + $0x48] sm:$0xf]
        %v615 = vld [vmem:[%s1 + $0x4c] sm:$0xf]
        %v616 = vld [vmem:[%s1 + $0x50] sm:$0xf]
        %v617 = vld [vmem:[%s1 + $0x54] sm:$0xf]
        %v618 = vld [vmem:[%s1 + $0x58] sm:$0xf]
        %v619 = vld [vmem:[%s1 + $0x5c] sm:$0xf]
        %v620 = vld [vmem:[%s1 + $0x60] sm:$0xf]
        %v621 = vld [vmem:[%s1 + $0x64] sm:$0xf]
        %v622 = vld [vmem:[%s1 + $0x68] sm:$0xf]
        %v623 = vld [vmem:[%s1 + $0x6c] sm:$0xf]
        %v624 = vld [vmem:[%s1 + $0x70] sm:$0xf]
        %v625 = vld [vmem:[%s1 + $0x74] sm:$0xf]
        %v626 = vld [vmem:[%s1 + $0x78] sm:$0xf]
        %v627 = vld [vmem:[%s1 + $0x7c] sm:$0xf]
        %v628 = vld [vmem:[%s2] sm:$0x1]
        %v630 = vlaneseq
        %v631 = vshrl.u32 %v630, 7
        %v632 = vsub.s32 0, %v631
        %v633 = vrot.slane %v628, %v632
        %v667 = vunpack.c.l.b16 %v596
        %v668 = vunpack.c.l.b16 %v597
        %v669 = vunpack.c.l.b16 %v598
        %v670 = vunpack.c.l.b16 %v599
        %v671 = vunpack.c.l.b16 %v600
        %v672 = vunpack.c.l.b16 %v601
        %v673 = vunpack.c.l.b16 %v602
        %v674 = vunpack.c.l.b16 %v603
        %v675 = vunpack.c.l.b16 %v604
        %v676 = vunpack.c.l.b16 %v605
        %v677 = vunpack.c.l.b16 %v606
        %v678 = vunpack.c.l.b16 %v607
        %v679 = vunpack.c.l.b16 %v608
        %v680 = vunpack.c.l.b16 %v609
        %v681 = vunpack.c.l.b16 %v610
        %v682 = vunpack.c.l.b16 %v611
        %v683 = vunpack.c.l.b16 %v612
        %v684 = vunpack.c.l.b16 %v613
        %v685 = vunpack.c.l.b16 %v614
        %v686 = vunpack.c.l.b16 %v615
        %v687 = vunpack.c.l.b16 %v616
        %v688 = vunpack.c.l.b16 %v617
        %v689 = vunpack.c.l.b16 %v618
        %v690 = vunpack.c.l.b16 %v619
        %v691 = vunpack.c.l.b16 %v620
        %v692 = vunpack.c.l.b16 %v621
        %v693 = vunpack.c.l.b16 %v622
        %v694 = vunpack.c.l.b16 %v623
        %v695 = vunpack.c.l.b16 %v624
        %v696 = vunpack.c.l.b16 %v625
        %v697 = vunpack.c.l.b16 %v626
        %v698 = vunpack.c.l.b16 %v627
        %v699 = vpack.c.b16 %v668, %v667
        %v700 = vpack.c.b16 %v670, %v669
        %v701 = vpack.c.b16 %v672, %v671
        %v702 = vpack.c.b16 %v674, %v673
        %v703 = vpack.c.b16 %v676, %v675
        %v704 = vpack.c.b16 %v678, %v677
        %v705 = vpack.c.b16 %v680, %v679
        %v706 = vpack.c.b16 %v682, %v681
        %v707 = vpack.c.b16 %v684, %v683
        %v708 = vpack.c.b16 %v686, %v685
        %v709 = vpack.c.b16 %v688, %v687
        %v710 = vpack.c.b16 %v690, %v689
        %v711 = vpack.c.b16 %v692, %v691
        %v712 = vpack.c.b16 %v694, %v693
        %v713 = vpack.c.b16 %v696, %v695
        %v714 = vpack.c.b16 %v698, %v697
        %731 = vmatprep.subr.bf16.mxu0 0
        %732 = vmatpush1.bf16.msra.mxu0 %v699
        %733 = vmatprep.subr.bf16.mxu0 0
        %734 = vmatpush1.bf16.msra.mxu0 %v700
        %735 = vmatprep.subr.bf16.mxu0 0
        %736 = vmatpush1.bf16.msra.mxu0 %v701
        %737 = vmatprep.subr.bf16.mxu0 0
        %738 = vmatpush1.bf16.msra.mxu0 %v702
        %739 = vmatprep.subr.bf16.mxu0 0
        %740 = vmatpush1.bf16.msra.mxu0 %v703
        %741 = vmatprep.subr.bf16.mxu0 0
        %742 = vmatpush1.bf16.msra.mxu0 %v704
        %743 = vmatprep.subr.bf16.mxu0 0
        %744 = vmatpush1.bf16.msra.mxu0 %v705
        %745 = vmatprep.subr.bf16.mxu0 0
        %746 = vmatpush1.bf16.msra.mxu0 %v706
        %747 = vmatprep.subr.bf16.mxu0 0
        %748 = vmatpush1.bf16.msra.mxu0 %v707
        %749 = vmatprep.subr.bf16.mxu0 0
        %750 = vmatpush1.bf16.msra.mxu0 %v708
        %751 = vmatprep.subr.bf16.mxu0 0
        %752 = vmatpush1.bf16.msra.mxu0 %v709
        %753 = vmatprep.subr.bf16.mxu0 0
        %754 = vmatpush1.bf16.msra.mxu0 %v710
        %755 = vmatprep.subr.bf16.mxu0 0
        %756 = vmatpush1.bf16.msra.mxu0 %v711
        %757 = vmatprep.subr.bf16.mxu0 0
        %758 = vmatpush1.bf16.msra.mxu0 %v712
        %759 = vmatprep.subr.bf16.mxu0 0
        %760 = vmatpush1.bf16.msra.mxu0 %v713
        %761 = vmatprep.subr.bf16.mxu0 0
        %762 = vmatpush1.bf16.msra.mxu0 %v714
        %763 = vmatprep.mubr.bf16.mxu0 %v595
        %764 = vmatmul.mubr.bf16.gmra.mrb[0].mxu0 %v594
        %v765 = vpop.f32.mrb[0].mxu0
        %v766 = vadd.f32 %v633, %v765
        %v767 = vpop.f32.mrb[0].mxu0
        %v768 = vpop.f32.mrb[0].mxu0
        %v769 = vadd.f32 %v633, %v768
        %v770 = vpop.f32.mrb[0].mxu0
        %771 = vdwg.mxu0
        %v772 = vmax.f32 %v766, 0.0
        %v773 = vmax.f32 %v769, 0.0
        %v774 = vadd.f32 %v772, 1.0
        %v775 = vadd.f32 %v773, 1.0
        %v776 = vlog2.pop %v774
        %v777 = vmul.f32 %v776, 0.6931472
        %v778 = vlog2.pop %v775
        %v779 = vmul.f32 %v778, 0.6931472
        %v780 = vpack.c.bf16 %v779, %v777
        %v781 = vld [vmem:[#allocation2] sm:$0xf]
        %v782 = vld [vmem:[#allocation2 + $0x4] sm:$0xf]
        %v783 = vld [vmem:[#allocation2 + $0x8] sm:$0xf]
        %v784 = vld [vmem:[#allocation2 + $0xc] sm:$0xf]
        %v785 = vld [vmem:[#allocation2 + $0x10] sm:$0xf]
        %v786 = vld [vmem:[#allocation2 + $0x14] sm:$0xf]
        %v787 = vld [vmem:[#allocation2 + $0x18] sm:$0xf]
        %v788 = vld [vmem:[#allocation2 + $0x1c] sm:$0xf]
        %v789 = vld [vmem:[#allocation2 + $0x20] sm:$0xf]
        %v790 = vld [vmem:[#allocation2 + $0x24] sm:$0xf]
        %v791 = vld [vmem:[#allocation2 + $0x28] sm:$0xf]
        %v792 = vld [vmem:[#allocation2 + $0x2c] sm:$0xf]
        %v793 = vld [vmem:[#allocation2 + $0x30] sm:$0xf]
        %v794 = vld [vmem:[#allocation2 + $0x34] sm:$0xf]
        %v795 = vld [vmem:[#allocation2 + $0x38] sm:$0xf]
        %v796 = vld [vmem:[#allocation2 + $0x3c] sm:$0xf]
        %v797 = vld [vmem:[#allocation4] sm:$0x1]
        %v799 = vlaneseq
        %v800 = vshrl.u32 %v799, 7
        %v801 = vsub.s32 0, %v800
        %v802 = vrot.slane %v797, %v801
        %v820 = vunpack.c.l.b16 %v781
        %v821 = vunpack.c.l.b16 %v782
        %v822 = vunpack.c.l.b16 %v783
        %v823 = vunpack.c.l.b16 %v784
        %v824 = vunpack.c.l.b16 %v785
        %v825 = vunpack.c.l.b16 %v786
        %v826 = vunpack.c.l.b16 %v787
        %v827 = vunpack.c.l.b16 %v788
        %v828 = vunpack.c.l.b16 %v789
        %v829 = vunpack.c.l.b16 %v790
        %v830 = vunpack.c.l.b16 %v791
        %v831 = vunpack.c.l.b16 %v792
        %v832 = vunpack.c.l.b16 %v793
        %v833 = vunpack.c.l.b16 %v794
        %v834 = vunpack.c.l.b16 %v795
        %v835 = vunpack.c.l.b16 %v796
        %v836 = vpack.c.b16 %v821, %v820
        %v837 = vpack.c.b16 %v823, %v822
        %v838 = vpack.c.b16 %v825, %v824
        %v839 = vpack.c.b16 %v827, %v826
        %v840 = vpack.c.b16 %v829, %v828
        %v841 = vpack.c.b16 %v831, %v830
        %v842 = vpack.c.b16 %v833, %v832
        %v843 = vpack.c.b16 %v835, %v834
        %852 = vmatprep.subr.bf16.mxu0 0
        %853 = vmatpush1.bf16.msra.mxu0 %v836
        %854 = vmatprep.subr.bf16.mxu0 0
        %855 = vmatpush1.bf16.msra.mxu0 %v837
        %856 = vmatprep.subr.bf16.mxu0 0
        %857 = vmatpush1.bf16.msra.mxu0 %v838
        %858 = vmatprep.subr.bf16.mxu0 0
        %859 = vmatpush1.bf16.msra.mxu0 %v839
        %860 = vmatprep.subr.bf16.mxu0 0
        %861 = vmatpush1.bf16.msra.mxu0 %v840
        %862 = vmatprep.subr.bf16.mxu0 0
        %863 = vmatpush1.bf16.msra.mxu0 %v841
        %864 = vmatprep.subr.bf16.mxu0 0
        %865 = vmatpush1.bf16.msra.mxu0 %v842
        %866 = vmatprep.subr.bf16.mxu0 0
        %867 = vmatpush1.bf16.msra.mxu0 %v843
        %868 = vmatprep.subr.bf16.mxu0 0
        %869 = vmatpush1.bf16.msra.mxu0 0
        %870 = vmatprep.subr.bf16.mxu0 0
        %871 = vmatpush1.bf16.msra.mxu0 0
        %872 = vmatprep.subr.bf16.mxu0 0
        %873 = vmatpush1.bf16.msra.mxu0 0
        %874 = vmatprep.subr.bf16.mxu0 0
        %875 = vmatpush1.bf16.msra.mxu0 0
        %876 = vmatprep.subr.bf16.mxu0 0
        %877 = vmatpush1.bf16.msra.mxu0 0
        %878 = vmatprep.subr.bf16.mxu0 0
        %879 = vmatpush1.bf16.msra.mxu0 0
        %880 = vmatprep.subr.bf16.mxu0 0
        %881 = vmatpush1.bf16.msra.mxu0 0
        %882 = vmatprep.subr.bf16.mxu0 0
        %883 = vmatpush1.bf16.msra.mxu0 0
        %884 = vmatprep.mubr.bf16.mxu0 0
        %885 = vmatmul.mubr.bf16.gmra.mrb[0].mxu0 %v780
        %v886 = vpop.f32.mrb[0].mxu0
        %v887 = vadd.f32 %v802, %v886
        %v888 = vpop.f32.mrb[0].mxu0
        %v889 = vpop.f32.mrb[0].mxu0
        %v890 = vadd.f32 %v802, %v889
        %v891 = vpop.f32.mrb[0].mxu0
        %892 = vdwg.mxu0
        %v893 = vmul.f32 %v887, %v887
        %v894 = vmul.f32 %v890, %v890
        %v895 = vmul.f32 %v887, %v893
        %v896 = vmul.f32 %v890, %v894
        %v897 = vmul.f32 %v895, 0.044715
        %v898 = vmul.f32 %v896, 0.044715
        %v899 = vadd.f32 %v887, %v897
        %v900 = vadd.f32 %v890, %v898
        %v901 = vmul.f32 %v899, 0.7978846
        %v902 = vmul.f32 %v900, 0.7978846
        %v903 = vtanh.pop %v901
        %v904 = vtanh.pop %v902
        %v905 = vadd.f32 %v903, 1.0
        %v906 = vadd.f32 %v904, 1.0
        %v907 = vmul.f32 %v905, 0.5
        %v908 = vmul.f32 %v906, 0.5
        %v909 = vmul.f32 %v887, %v907
        %v910 = vmul.f32 %v890, %v908
        %v911 = vld [vmem:[#allocation6] sm:$0xf]
        %v912 = vld [vmem:[#allocation6 + $0x4] sm:$0xf]
        %v913 = vpack.c.bf16 %v910, %v909
        %v914 = vld [vmem:[%s6] sm:$0xff]
        %v915 = vld [vmem:[%s6 + $0x8] sm:$0xff]
        %917 = vset.pattern.permute.xlu0 0
        %918 = vperm.xlu0 %917, %v914
        %v919 = vpop.permute.xlu0 %918
        %922 = vset.pattern.permute.xlu0 0
        %923 = vperm.xlu0 %922, %v915
        %v924 = vpop.permute.xlu0 %923
        %v928 = vunpack.c.l.b16 %v911
        %v929 = vunpack.c.l.b16 %v912
        %v930 = vpack.c.b16 %v929, %v928
        %vm931 = vcmask 130048
        %v933 = vsel %vm931, %v930, 0
        %935 = vmatprep.subr.bf16.mxu0 0
        %936 = vmatpush1.bf16.msra.mxu0 %v913
        %937 = vmatprep.subr.bf16.mxu0 0
        %938 = vmatpush1.bf16.msra.mxu0 0
        %939 = vmatprep.subr.bf16.mxu0 0
        %940 = vmatpush1.bf16.msra.mxu0 0
        %941 = vmatprep.subr.bf16.mxu0 0
        %942 = vmatpush1.bf16.msra.mxu0 0
        %943 = vmatprep.subr.bf16.mxu0 0
        %944 = vmatpush1.bf16.msra.mxu0 0
        %945 = vmatprep.subr.bf16.mxu0 0
        %946 = vmatpush1.bf16.msra.mxu0 0
        %947 = vmatprep.subr.bf16.mxu0 0
        %948 = vmatpush1.bf16.msra.mxu0 0
        %949 = vmatprep.subr.bf16.mxu0 0
        %950 = vmatpush1.bf16.msra.mxu0 0
        %951 = vmatprep.subr.bf16.mxu0 0
        %952 = vmatpush1.bf16.msra.mxu0 0
        %953 = vmatprep.subr.bf16.mxu0 0
        %954 = vmatpush1.bf16.msra.mxu0 0
        %955 = vmatprep.subr.bf16.mxu0 0
        %956 = vmatpush1.bf16.msra.mxu0 0
        %957 = vmatprep.subr.bf16.mxu0 0
        %958 = vmatpush1.bf16.msra.mxu0 0
        %959 = vmatprep.subr.bf16.mxu0 0
        %960 = vmatpush1.bf16.msra.mxu0 0
        %961 = vmatprep.subr.bf16.mxu0 0
        %962 = vmatpush1.bf16.msra.mxu0 0
        %963 = vmatprep.subr.bf16.mxu0 0
        %964 = vmatpush1.bf16.msra.mxu0 0
        %965 = vmatprep.subr.bf16.mxu0 0
        %966 = vmatpush1.bf16.msra.mxu0 0
        %967 = vmatprep.mubr.bf16.mxu0 0
        %968 = vmatmul.mubr.bf16.gmra.mrb[0].mxu0 %v933
        %v969 = vpop.f32.mrb[0].mxu0
        %v970 = vadd.f32 %v919, %v969
        %v971 = vpop.f32.mrb[0].mxu0
        %v972 = vpop.f32.mrb[0].mxu0
        %v973 = vadd.f32 %v924, %v972
        %v974 = vpop.f32.mrb[0].mxu0
        %975 = vdwg.mxu0
        %v976 = vmul.f32 %v970, %v970
        %v977 = vmul.f32 %v973, %v973
        %v978 = vmul.f32 %v970, %v976
        %v979 = vmul.f32 %v973, %v977
        %v980 = vmul.f32 %v978, 0.044715
        %v981 = vmul.f32 %v979, 0.044715
        %v982 = vadd.f32 %v970, %v980
        %v983 = vadd.f32 %v973, %v981
        %v984 = vmul.f32 %v982, 0.7978846
        %v985 = vmul.f32 %v983, 0.7978846
        %v986 = vtanh.pop %v984
        %v987 = vtanh.pop %v985
        %v988 = vadd.f32 %v986, 1.0
        %v989 = vadd.f32 %v987, 1.0
        %v990 = vmul.f32 %v988, 0.5
        %v991 = vmul.f32 %v989, 0.5
        %v992 = vmul.f32 %v970, %v990
        %v993 = vmul.f32 %v973, %v991
        %v994 = vadd.f32 %v909, %v992
        %v995 = vadd.f32 %v910, %v993
        %v996 = vpack.c.bf16 %v995, %v994
        %v997 = vld [vmem:[#allocation7] sm:$0xf]
        %v998 = vld [vmem:[#allocation7 + $0x4] sm:$0xf]
        %v999 = vld [vmem:[#allocation7 + $0x8] sm:$0xf]
        %v1000 = vld [vmem:[#allocation7 + $0xc] sm:$0xf]
        %v1001 = vld [vmem:[#allocation7 + $0x10] sm:$0xf]
        %v1002 = vld [vmem:[#allocation7 + $0x14] sm:$0xf]
        %v1003 = vld [vmem:[#allocation7 + $0x18] sm:$0xf]
        %v1004 = vld [vmem:[#allocation7 + $0x1c] sm:$0xf]
        %v1005 = vld [vmem:[#allocation7 + $0x20] sm:$0xf]
        %v1006 = vld [vmem:[#allocation7 + $0x24] sm:$0xf]
        %v1007 = vld [vmem:[#allocation7 + $0x28] sm:$0xf]
        %v1008 = vld [vmem:[#allocation7 + $0x2c] sm:$0xf]
        %v1009 = vld [vmem:[#allocation7 + $0x30] sm:$0xf]
        %v1010 = vld [vmem:[#allocation7 + $0x34] sm:$0xf]
        %v1011 = vld [vmem:[#allocation7 + $0x38] sm:$0xf]
        %v1012 = vld [vmem:[#allocation7 + $0x3c] sm:$0xf]
        %v1013 = vld [vmem:[%s8] sm:$0x1]
        %v1015 = vlaneseq
        %v1016 = vshrl.u32 %v1015, 7
        %v1017 = vsub.s32 0, %v1016
        %v1018 = vrot.slane %v1013, %v1017
        %v1036 = vunpack.c.l.b16 %v997
        %v1037 = vunpack.c.l.b16 %v998
        %v1038 = vunpack.c.l.b16 %v999
        %v1039 = vunpack.c.l.b16 %v1000
        %v1040 = vunpack.c.l.b16 %v1001
        %v1041 = vunpack.c.l.b16 %v1002
        %v1042 = vunpack.c.l.b16 %v1003
        %v1043 = vunpack.c.l.b16 %v1004
        %v1044 = vunpack.c.l.b16 %v1005
        %v1045 = vunpack.c.l.b16 %v1006
        %v1046 = vunpack.c.l.b16 %v1007
        %v1047 = vunpack.c.l.b16 %v1008
        %v1048 = vunpack.c.l.b16 %v1009
        %v1049 = vunpack.c.l.b16 %v1010
        %v1050 = vunpack.c.l.b16 %v1011
        %v1051 = vunpack.c.l.b16 %v1012
        %v1052 = vpack.c.b16 %v1037, %v1036
        %v1053 = vpack.c.b16 %v1039, %v1038
        %v1054 = vpack.c.b16 %v1041, %v1040
        %v1055 = vpack.c.b16 %v1043, %v1042
        %v1056 = vpack.c.b16 %v1045, %v1044
        %v1057 = vpack.c.b16 %v1047, %v1046
        %v1058 = vpack.c.b16 %v1049, %v1048
        %v1059 = vpack.c.b16 %v1051, %v1050
        %1068 = vmatprep.subr.bf16.mxu0 0
        %1069 = vmatpush1.bf16.msra.mxu0 %v1052
        %1070 = vmatprep.subr.bf16.mxu0 0
        %1071 = vmatpush1.bf16.msra.mxu0 %v1053
        %1072 = vmatprep.subr.bf16.mxu0 0
        %1073 = vmatpush1.bf16.msra.mxu0 %v1054
        %1074 = vmatprep.subr.bf16.mxu0 0
        %1075 = vmatpush1.bf16.msra.mxu0 %v1055
        %1076 = vmatprep.subr.bf16.mxu0 0
        %1077 = vmatpush1.bf16.msra.mxu0 %v1056
        %1078 = vmatprep.subr.bf16.mxu0 0
        %1079 = vmatpush1.bf16.msra.mxu0 %v1057
        %1080 = vmatprep.subr.bf16.mxu0 0
        %1081 = vmatpush1.bf16.msra.mxu0 %v1058
        %1082 = vmatprep.subr.bf16.mxu0 0
        %1083 = vmatpush1.bf16.msra.mxu0 %v1059
        %1084 = vmatprep.subr.bf16.mxu0 0
        %1085 = vmatpush1.bf16.msra.mxu0 0
        %1086 = vmatprep.subr.bf16.mxu0 0
        %1087 = vmatpush1.bf16.msra.mxu0 0
        %1088 = vmatprep.subr.bf16.mxu0 0
        %1089 = vmatpush1.bf16.msra.mxu0 0
        %1090 = vmatprep.subr.bf16.mxu0 0
        %1091 = vmatpush1.bf16.msra.mxu0 0
        %1092 = vmatprep.subr.bf16.mxu0 0
        %1093 = vmatpush1.bf16.msra.mxu0 0
        %1094 = vmatprep.subr.bf16.mxu0 0
        %1095 = vmatpush1.bf16.msra.mxu0 0
        %1096 = vmatprep.subr.bf16.mxu0 0
        %1097 = vmatpush1.bf16.msra.mxu0 0
        %1098 = vmatprep.subr.bf16.mxu0 0
        %1099 = vmatpush1.bf16.msra.mxu0 0
        %1100 = vmatprep.mubr.bf16.mxu0 0
        %1101 = vmatmul.mubr.bf16.gmra.mrb[0].mxu0 %v996
        %v1102 = vpop.f32.mrb[0].mxu0
        %v1103 = vadd.f32 %v1018, %v1102
        %v1104 = vpop.f32.mrb[0].mxu0
        %v1105 = vpop.f32.mrb[0].mxu0
        %v1106 = vadd.f32 %v1018, %v1105
        %v1107 = vpop.f32.mrb[0].mxu0
        %1108 = vdwg.mxu0
        %v1109 = vmul.f32 %v1103, %v1103
        %v1110 = vmul.f32 %v1106, %v1106
        %v1111 = vmul.f32 %v1103, %v1109
        %v1112 = vmul.f32 %v1106, %v1110
        %v1113 = vmul.f32 %v1111, 0.044715
        %v1114 = vmul.f32 %v1112, 0.044715
        %v1115 = vadd.f32 %v1103, %v1113
        %v1116 = vadd.f32 %v1106, %v1114
        %v1117 = vmul.f32 %v1115, 0.7978846
        %v1118 = vmul.f32 %v1116, 0.7978846
        %v1119 = vtanh.pop %v1117
        %v1120 = vtanh.pop %v1118
        %v1121 = vadd.f32 %v1119, 1.0
        %v1122 = vadd.f32 %v1120, 1.0
        %v1123 = vmul.f32 %v1121, 0.5
        %v1124 = vmul.f32 %v1122, 0.5
        %v1125 = vmul.f32 %v1103, %v1123
        %v1126 = vmul.f32 %v1106, %v1124
        %v1127 = vadd.f32 %v994, %v1125
        %v1128 = vadd.f32 %v995, %v1126
        %s1129 = scalar_lea.vmem [#allocation6], 8
        %v1130 = vld [vmem:[%s1129] sm:$0xf]
        %v1131 = vld [vmem:[%s1129 + $0x4] sm:$0xf]
        %v1132 = vpack.c.bf16 %v1128, %v1127
        %s1133 = scalar_lea.vmem %s6, 16
        %v1134 = vld [vmem:[%s1133] sm:$0xff]
        %v1135 = vld [vmem:[%s1133 + $0x8] sm:$0xff]
        %1137 = vset.pattern.permute.xlu0 0
        %1138 = vperm.xlu0 %1137, %v1134
        %v1139 = vpop.permute.xlu0 %1138
        %1142 = vset.pattern.permute.xlu0 0
        %1143 = vperm.xlu0 %1142, %v1135
        %v1144 = vpop.permute.xlu0 %1143
        %v1148 = vunpack.c.l.b16 %v1130
        %v1149 = vunpack.c.l.b16 %v1131
        %v1150 = vpack.c.b16 %v1149, %v1148
        %v1152 = vsel %vm931, %v1150, 0
        %1154 = vmatprep.subr.bf16.mxu0 0
        %1155 = vmatpush1.bf16.msra.mxu0 %v1132
        %1156 = vmatprep.subr.bf16.mxu0 0
        %1157 = vmatpush1.bf16.msra.mxu0 0
        %1158 = vmatprep.subr.bf16.mxu0 0
        %1159 = vmatpush1.bf16.msra.mxu0 0
        %1160 = vmatprep.subr.bf16.mxu0 0
        %1161 = vmatpush1.bf16.msra.mxu0 0
        %1162 = vmatprep.subr.bf16.mxu0 0
        %1163 = vmatpush1.bf16.msra.mxu0 0
        %1164 = vmatprep.subr.bf16.mxu0 0
        %1165 = vmatpush1.bf16.msra.mxu0 0
        %1166 = vmatprep.subr.bf16.mxu0 0
        %1167 = vmatpush1.bf16.msra.mxu0 0
        %1168 = vmatprep.subr.bf16.mxu0 0
        %1169 = vmatpush1.bf16.msra.mxu0 0
        %1170 = vmatprep.subr.bf16.mxu0 0
        %1171 = vmatpush1.bf16.msra.mxu0 0
        %1172 = vmatprep.subr.bf16.mxu0 0
        %1173 = vmatpush1.bf16.msra.mxu0 0
        %1174 = vmatprep.subr.bf16.mxu0 0
        %1175 = vmatpush1.bf16.msra.mxu0 0
        %1176 = vmatprep.subr.bf16.mxu0 0
        %1177 = vmatpush1.bf16.msra.mxu0 0
        %1178 = vmatprep.subr.bf16.mxu0 0
        %1179 = vmatpush1.bf16.msra.mxu0 0
        %1180 = vmatprep.subr.bf16.mxu0 0
        %1181 = vmatpush1.bf16.msra.mxu0 0
        %1182 = vmatprep.subr.bf16.mxu0 0
        %1183 = vmatpush1.bf16.msra.mxu0 0
        %1184 = vmatprep.subr.bf16.mxu0 0
        %1185 = vmatpush1.bf16.msra.mxu0 0
        %1186 = vmatprep.mubr.bf16.mxu0 0
        %1187 = vmatmul.mubr.bf16.gmra.mrb[0].mxu0 %v1152
        %v1188 = vpop.f32.mrb[0].mxu0
        %v1189 = vadd.f32 %v1139, %v1188
        %v1190 = vpop.f32.mrb[0].mxu0
        %v1191 = vpop.f32.mrb[0].mxu0
        %v1192 = vadd.f32 %v1144, %v1191
        %v1193 = vpop.f32.mrb[0].mxu0
        %1194 = vdwg.mxu0
        %v1195 = vmul.f32 %v1189, %v1189
        %v1196 = vmul.f32 %v1192, %v1192
        %v1197 = vmul.f32 %v1189, %v1195
        %v1198 = vmul.f32 %v1192, %v1196
        %v1199 = vmul.f32 %v1197, 0.044715
        %v1200 = vmul.f32 %v1198, 0.044715
        %v1201 = vadd.f32 %v1189, %v1199
        %v1202 = vadd.f32 %v1192, %v1200
        %v1203 = vmul.f32 %v1201, 0.7978846
        %v1204 = vmul.f32 %v1202, 0.7978846
        %v1205 = vtanh.pop %v1203
        %v1206 = vtanh.pop %v1204
        %v1207 = vadd.f32 %v1205, 1.0
        %v1208 = vadd.f32 %v1206, 1.0
        %v1209 = vmul.f32 %v1207, 0.5
        %v1210 = vmul.f32 %v1208, 0.5
        %v1211 = vmul.f32 %v1189, %v1209
        %v1212 = vmul.f32 %v1192, %v1210
        %v1213 = vadd.f32 %v1127, %v1211
        %v1214 = vadd.f32 %v1128, %v1212
        %v1215 = vpack.c.bf16 %v1214, %v1213
        %s1216 = scalar_lea.vmem [#allocation7], 64
        %v1217 = vld [vmem:[%s1216] sm:$0xf]
        %v1218 = vld [vmem:[%s1216 + $0x4] sm:$0xf]
        %v1219 = vld [vmem:[%s1216 + $0x8] sm:$0xf]
        %v1220 = vld [vmem:[%s1216 + $0xc] sm:$0xf]
        %v1221 = vld [vmem:[%s1216 + $0x10] sm:$0xf]
        %v1222 = vld [vmem:[%s1216 + $0x14] sm:$0xf]
        %v1223 = vld [vmem:[%s1216 + $0x18] sm:$0xf]
        %v1224 = vld [vmem:[%s1216 + $0x1c] sm:$0xf]
        %v1225 = vld [vmem:[%s1216 + $0x20] sm:$0xf]
        %v1226 = vld [vmem:[%s1216 + $0x24] sm:$0xf]
        %v1227 = vld [vmem:[%s1216 + $0x28] sm:$0xf]
        %v1228 = vld [vmem:[%s1216 + $0x2c] sm:$0xf]
        %v1229 = vld [vmem:[%s1216 + $0x30] sm:$0xf]
        %v1230 = vld [vmem:[%s1216 + $0x34] sm:$0xf]
        %v1231 = vld [vmem:[%s1216 + $0x38] sm:$0xf]
        %v1232 = vld [vmem:[%s1216 + $0x3c] sm:$0xf]
        %s1233 = scalar_lea.vmem %s8, 1
        %v1234 = vld [vmem:[%s1233] sm:$0x1]
        %v1236 = vlaneseq
        %v1237 = vshrl.u32 %v1236, 7
        %v1238 = vsub.s32 0, %v1237
        %v1239 = vrot.slane %v1234, %v1238
        %v1257 = vunpack.c.l.b16 %v1217
        %v1258 = vunpack.c.l.b16 %v1218
        %v1259 = vunpack.c.l.b16 %v1219
        %v1260 = vunpack.c.l.b16 %v1220
        %v1261 = vunpack.c.l.b16 %v1221
        %v1262 = vunpack.c.l.b16 %v1222
        %v1263 = vunpack.c.l.b16 %v1223
        %v1264 = vunpack.c.l.b16 %v1224
        %v1265 = vunpack.c.l.b16 %v1225
        %v1266 = vunpack.c.l.b16 %v1226
        %v1267 = vunpack.c.l.b16 %v1227
        %v1268 = vunpack.c.l.b16 %v1228
        %v1269 = vunpack.c.l.b16 %v1229
        %v1270 = vunpack.c.l.b16 %v1230
        %v1271 = vunpack.c.l.b16 %v1231
        %v1272 = vunpack.c.l.b16 %v1232
        %v1273 = vpack.c.b16 %v1258, %v1257
        %v1274 = vpack.c.b16 %v1260, %v1259
        %v1275 = vpack.c.b16 %v1262, %v1261
        %v1276 = vpack.c.b16 %v1264, %v1263
        %v1277 = vpack.c.b16 %v1266, %v1265
        %v1278 = vpack.c.b16 %v1268, %v1267
        %v1279 = vpack.c.b16 %v1270, %v1269
        %v1280 = vpack.c.b16 %v1272, %v1271
        %1289 = vmatprep.subr.bf16.mxu0 0
        %1290 = vmatpush1.bf16.msra.mxu0 %v1273
        %1291 = vmatprep.subr.bf16.mxu0 0
        %1292 = vmatpush1.bf16.msra.mxu0 %v1274
        %1293 = vmatprep.subr.bf16.mxu0 0
        %1294 = vmatpush1.bf16.msra.mxu0 %v1275
        %1295 = vmatprep.subr.bf16.mxu0 0
        %1296 = vmatpush1.bf16.msra.mxu0 %v1276
        %1297 = vmatprep.subr.bf16.mxu0 0
        %1298 = vmatpush1.bf16.msra.mxu0 %v1277
        %1299 = vmatprep.subr.bf16.mxu0 0
        %1300 = vmatpush1.bf16.msra.mxu0 %v1278
        %1301 = vmatprep.subr.bf16.mxu0 0
        %1302 = vmatpush1.bf16.msra.mxu0 %v1279
        %1303 = vmatprep.subr.bf16.mxu0 0
        %1304 = vmatpush1.bf16.msra.mxu0 %v1280
        %1305 = vmatprep.subr.bf16.mxu0 0
        %1306 = vmatpush1.bf16.msra.mxu0 0
        %1307 = vmatprep.subr.bf16.mxu0 0
        %1308 = vmatpush1.bf16.msra.mxu0 0
        %1309 = vmatprep.subr.bf16.mxu0 0
        %1310 = vmatpush1.bf16.msra.mxu0 0
        %1311 = vmatprep.subr.bf16.mxu0 0
        %1312 = vmatpush1.bf16.msra.mxu0 0
        %1313 = vmatprep.subr.bf16.mxu0 0
        %1314 = vmatpush1.bf16.msra.mxu0 0
        %1315 = vmatprep.subr.bf16.mxu0 0
        %1316 = vmatpush1.bf16.msra.mxu0 0
        %1317 = vmatprep.subr.bf16.mxu0 0
        %1318 = vmatpush1.bf16.msra.mxu0 0
        %1319 = vmatprep.subr.bf16.mxu0 0
        %1320 = vmatpush1.bf16.msra.mxu0 0
        %1321 = vmatprep.mubr.bf16.mxu0 0
        %1322 = vmatmul.mubr.bf16.gmra.mrb[0].mxu0 %v1215
        %v1323 = vpop.f32.mrb[0].mxu0
        %v1324 = vadd.f32 %v1239, %v1323
        %v1325 = vpop.f32.mrb[0].mxu0
        %v1326 = vpop.f32.mrb[0].mxu0
        %v1327 = vadd.f32 %v1239, %v1326
        %v1328 = vpop.f32.mrb[0].mxu0
        %1329 = vdwg.mxu0
        %v1330 = vmul.f32 %v1324, %v1324
        %v1331 = vmul.f32 %v1327, %v1327
        %v1332 = vmul.f32 %v1324, %v1330
        %v1333 = vmul.f32 %v1327, %v1331
        %v1334 = vmul.f32 %v1332, 0.044715
        %v1335 = vmul.f32 %v1333, 0.044715
        %v1336 = vadd.f32 %v1324, %v1334
        %v1337 = vadd.f32 %v1327, %v1335
        %v1338 = vmul.f32 %v1336, 0.7978846
        %v1339 = vmul.f32 %v1337, 0.7978846
        %v1340 = vtanh.pop %v1338
        %v1341 = vtanh.pop %v1339
        %v1342 = vadd.f32 %v1340, 1.0
        %v1343 = vadd.f32 %v1341, 1.0
        %v1344 = vmul.f32 %v1342, 0.5
        %v1345 = vmul.f32 %v1343, 0.5
        %v1346 = vmul.f32 %v1324, %v1344
        %v1347 = vmul.f32 %v1327, %v1345
        %v1348 = vadd.f32 %v1213, %v1346
        %v1349 = vadd.f32 %v1214, %v1347
        %v1350 = vpack.c.bf16 %v1349, %v1348
        %v1351 = vld [vmem:[#allocation9] sm:$0xf]
        %v1352 = vld [vmem:[#allocation9 + $0x4] sm:$0xf]
        %v1353 = vld [vmem:[#allocation9 + $0x8] sm:$0xf]
        %v1354 = vld [vmem:[#allocation9 + $0xc] sm:$0xf]
        %v1355 = vld [vmem:[#allocation9 + $0x10] sm:$0xf]
        %v1356 = vld [vmem:[#allocation9 + $0x14] sm:$0xf]
        %v1357 = vld [vmem:[#allocation9 + $0x18] sm:$0xf]
        %v1358 = vld [vmem:[#allocation9 + $0x1c] sm:$0xf]
        %v1359 = vld [vmem:[#allocation9 + $0x20] sm:$0xf]
        %v1360 = vld [vmem:[#allocation9 + $0x24] sm:$0xf]
        %v1361 = vld [vmem:[#allocation9 + $0x28] sm:$0xf]
        %v1362 = vld [vmem:[#allocation9 + $0x2c] sm:$0xf]
        %v1363 = vld [vmem:[#allocation9 + $0x30] sm:$0xf]
        %v1364 = vld [vmem:[#allocation9 + $0x34] sm:$0xf]
        %v1365 = vld [vmem:[#allocation9 + $0x38] sm:$0xf]
        %v1366 = vld [vmem:[#allocation9 + $0x3c] sm:$0xf]
        %v1367 = vld [vmem:[#allocation10] sm:$0x1]
        %v1369 = vlaneseq
        %v1370 = vshrl.u32 %v1369, 7
        %v1371 = vsub.s32 0, %v1370
        %v1372 = vrot.slane %v1367, %v1371
        %v1390 = vunpack.c.l.b16 %v1351
        %v1391 = vunpack.c.l.b16 %v1352
        %v1392 = vunpack.c.l.b16 %v1353
        %v1393 = vunpack.c.l.b16 %v1354
        %v1394 = vunpack.c.l.b16 %v1355
        %v1395 = vunpack.c.l.b16 %v1356
        %v1396 = vunpack.c.l.b16 %v1357
        %v1397 = vunpack.c.l.b16 %v1358
        %v1398 = vunpack.c.l.b16 %v1359
        %v1399 = vunpack.c.l.b16 %v1360
        %v1400 = vunpack.c.l.b16 %v1361
        %v1401 = vunpack.c.l.b16 %v1362
        %v1402 = vunpack.c.l.b16 %v1363
        %v1403 = vunpack.c.l.b16 %v1364
        %v1404 = vunpack.c.l.b16 %v1365
        %v1405 = vunpack.c.l.b16 %v1366
        %v1406 = vpack.c.b16 %v1391, %v1390
        %v1407 = vpack.c.b16 %v1393, %v1392
        %v1408 = vpack.c.b16 %v1395, %v1394
        %v1409 = vpack.c.b16 %v1397, %v1396
        %v1410 = vpack.c.b16 %v1399, %v1398
        %v1411 = vpack.c.b16 %v1401, %v1400
        %v1412 = vpack.c.b16 %v1403, %v1402
        %v1413 = vpack.c.b16 %v1405, %v1404
        %1422 = vmatprep.subr.bf16.mxu0 0
        %1423 = vmatpush1.bf16.msra.mxu0 %v1406
        %1424 = vmatprep.subr.bf16.mxu0 0
        %1425 = vmatpush1.bf16.msra.mxu0 %v1407
        %1426 = vmatprep.subr.bf16.mxu0 0
        %1427 = vmatpush1.bf16.msra.mxu0 %v1408
        %1428 = vmatprep.subr.bf16.mxu0 0
        %1429 = vmatpush1.bf16.msra.mxu0 %v1409
        %1430 = vmatprep.subr.bf16.mxu0 0
        %1431 = vmatpush1.bf16.msra.mxu0 %v1410
        %1432 = vmatprep.subr.bf16.mxu0 0
        %1433 = vmatpush1.bf16.msra.mxu0 %v1411
        %1434 = vmatprep.subr.bf16.mxu0 0
        %1435 = vmatpush1.bf16.msra.mxu0 %v1412
        %1436 = vmatprep.subr.bf16.mxu0 0
        %1437 = vmatpush1.bf16.msra.mxu0 %v1413
        %1438 = vmatprep.subr.bf16.mxu0 0
        %1439 = vmatpush1.bf16.msra.mxu0 0
        %1440 = vmatprep.subr.bf16.mxu0 0
        %1441 = vmatpush1.bf16.msra.mxu0 0
        %1442 = vmatprep.subr.bf16.mxu0 0
        %1443 = vmatpush1.bf16.msra.mxu0 0
        %1444 = vmatprep.subr.bf16.mxu0 0
        %1445 = vmatpush1.bf16.msra.mxu0 0
        %1446 = vmatprep.subr.bf16.mxu0 0
        %1447 = vmatpush1.bf16.msra.mxu0 0
        %1448 = vmatprep.subr.bf16.mxu0 0
        %1449 = vmatpush1.bf16.msra.mxu0 0
        %1450 = vmatprep.subr.bf16.mxu0 0
        %1451 = vmatpush1.bf16.msra.mxu0 0
        %1452 = vmatprep.subr.bf16.mxu0 0
        %1453 = vmatpush1.bf16.msra.mxu0 0
        %1454 = vmatprep.mubr.bf16.mxu0 0
        %1455 = vmatmul.mubr.bf16.gmra.mrb[0].mxu0 %v1350
        %v1456 = vpop.f32.mrb[0].mxu0
        %v1457 = vadd.f32 %v1372, %v1456
        %v1458 = vpop.f32.mrb[0].mxu0
        %v1459 = vpop.f32.mrb[0].mxu0
        %v1460 = vadd.f32 %v1372, %v1459
        %v1461 = vpop.f32.mrb[0].mxu0
        %1462 = vdwg.mxu0
        %v1463 = vtanh.pop %v1457
        %v1464 = vtanh.pop %v1460
        %v1465 = vld [vmem:[#allocation12] sm:$0x1]
        %v1467 = vlaneseq
        %v1468 = vshrl.u32 %v1467, 7
        %v1469 = vsub.s32 0, %v1468
        %v1470 = vrot.slane %v1465, %v1469
        %v1472 = vmul.f32 %v1463, %v1470
        %v1473 = vmul.f32 %v1464, %v1470
        %1474 = vadd.xlane.f32.xlu0 %v1472
        %v1475 = vpop.xlane.xlu0 %1474
        %1476 = vadd.xlane.f32.xlu0 %v1473
        %v1477 = vpop.xlane.xlu0 %1476
        %v1478 = vmax.f32 %v1475, %v1477
        %v1479 = vrot.slane %v1478, 4
        %v1480 = vmax.f32 %v1478, %v1479
        %v1481 = vrot.slane %v1480, 2
        %v1482 = vmax.f32 %v1480, %v1481
        %v1483 = vrot.slane %v1482, 1
        %v1484 = vmax.f32 %v1482, %v1483
        %v1485 = vsub.f32 %v1475, %v1484
        %v1486 = vsub.f32 %v1477, %v1484
        %v1487 = vmul.f32 %v1485, 1.442695
        %v1488 = vpow.pop %v1487
        %v1489 = vmul.f32 %v1486, 1.442695
        %v1490 = vpow.pop %v1489
        %v1491 = vadd.f32 %v1488, %v1490
        %v1492 = vrot.slane %v1491, 4
        %v1493 = vadd.f32 %v1491, %v1492
        %v1494 = vrot.slane %v1493, 2
        %v1495 = vadd.f32 %v1493, %v1494
        %v1496 = vrot.slane %v1495, 1
        %v1497 = vadd.f32 %v1495, %v1496
        %v1498 = vrcp.pop %v1497
        %v1499 = vmul.f32 %v1488, %v1498
        %v1500 = vmul.f32 %v1490, %v1498
        %v1501 = vmul.f32 %v1499, %v1348
        %v1502 = vmul.f32 %v1500, %v1349
        %v1503 = vadd.f32 %v1501, %v1502
        %v1504 = vrot.slane %v1503, 4
        %v1505 = vadd.f32 %v1503, %v1504
        %v1506 = vrot.slane %v1505, 2
        %v1507 = vadd.f32 %v1505, %v1506
        %v1508 = vrot.slane %v1507, 1
        %v1509 = vadd.f32 %v1507, %v1508
        %v1510 = vsub.f32 %v1348, %v1509
        %v1511 = vsub.f32 %v1349, %v1509
        %v1512 = vmul.f32 %v1499, %v1510
        %v1513 = vmul.f32 %v1500, %v1511
        %v1514 = vmul.f32 %v1512, %v1510
        %v1515 = vmul.f32 %v1513, %v1511
        %v1516 = vadd.f32 %v1514, %v1515
        %v1517 = vrot.slane %v1516, 4
        %v1518 = vadd.f32 %v1516, %v1517
        %v1519 = vrot.slane %v1518, 2
        %v1520 = vadd.f32 %v1518, %v1519
        %v1521 = vrot.slane %v1520, 1
        %v1522 = vadd.f32 %v1520, %v1521
        %v1523 = vmax.f32 %v1522, 1e-06
        %v1524 = vrsqrt.pop %v1523
        %v1525 = vmul.f32 %v1523, %v1524
        %vm1526 = vcmp.eq.f32.partialorder %v1523, inf
        %v1527 = vsel %vm1526, %v1523, %v1525
        %vm1528 = vcmp.eq.f32.partialorder %v1523, 0.0
        %v1529 = vand.u32 %v1523, 2147483648
        %v1530 = vsel %vm1528, %v1529, %v1527
        %v1531 = vpack.c.bf16 %v1509, %v1509
        %v1532 = vpack.c.bf16 %v1530, %v1530
        %v1533 = vld [vmem:[#allocation13] sm:$0xff]
        %v1534 = vld [vmem:[#allocation13 + $0x8] sm:$0xff]
        %v1535 = vld [vmem:[#allocation13 + $0x10] sm:$0xff]
        %v1536 = vld [vmem:[#allocation13 + $0x18] sm:$0xff]
        %v1537 = vld [vmem:[#allocation13 + $0x20] sm:$0xff]
        %v1538 = vld [vmem:[#allocation13 + $0x28] sm:$0xff]
        %v1539 = vld [vmem:[#allocation13 + $0x30] sm:$0xff]
        %v1540 = vld [vmem:[#allocation13 + $0x38] sm:$0xff]
        %v1541 = vld [vmem:[#allocation13 + $0x40] sm:$0xff]
        %v1542 = vld [vmem:[#allocation13 + $0x48] sm:$0xff]
        %v1543 = vld [vmem:[#allocation13 + $0x50] sm:$0xff]
        %v1544 = vld [vmem:[#allocation13 + $0x58] sm:$0xff]
        %v1545 = vld [vmem:[#allocation13 + $0x60] sm:$0xff]
        %v1546 = vld [vmem:[#allocation13 + $0x68] sm:$0xff]
        %v1547 = vld [vmem:[#allocation13 + $0x70] sm:$0xff]
        %v1548 = vld [vmem:[#allocation13 + $0x78] sm:$0xff]
        %v1549 = vld [vmem:[#allocation13 + $0x80] sm:$0xff]
        %v1550 = vld [vmem:[#allocation13 + $0x88] sm:$0xff]
        %v1551 = vld [vmem:[#allocation13 + $0x90] sm:$0xff]
        %v1552 = vld [vmem:[#allocation13 + $0x98] sm:$0xff]
        %v1553 = vld [vmem:[#allocation13 + $0xa0] sm:$0xff]
        %v1554 = vld [vmem:[#allocation13 + $0xa8] sm:$0xff]
        %v1555 = vld [vmem:[#allocation13 + $0xb0] sm:$0xff]
        %v1556 = vld [vmem:[#allocation13 + $0xb8] sm:$0xff]
        %v1557 = vld [vmem:[#allocation13 + $0xc0] sm:$0xff]
        %v1558 = vld [vmem:[#allocation13 + $0xc8] sm:$0xff]
        %v1559 = vld [vmem:[#allocation13 + $0xd0] sm:$0xff]
        %v1560 = vld [vmem:[#allocation13 + $0xd8] sm:$0xff]
        %v1561 = vld [vmem:[#allocation13 + $0xe0] sm:$0xff]
        %v1562 = vld [vmem:[#allocation13 + $0xe8] sm:$0xff]
        %v1563 = vld [vmem:[#allocation13 + $0xf0] sm:$0xff]
        %v1564 = vld [vmem:[#allocation13 + $0xf8] sm:$0xff]
        %v1565 = vld [vmem:[#allocation15] sm:$0x3]
        %v1598 = vunpack.c.l.b16 %v1533
        %v1599 = vunpack.c.h.b16 %v1533
        %v1600 = vunpack.c.l.b16 %v1534
        %v1601 = vunpack.c.h.b16 %v1534
        %v1602 = vunpack.c.l.b16 %v1535
        %v1603 = vunpack.c.h.b16 %v1535
        %v1604 = vunpack.c.l.b16 %v1536
        %v1605 = vunpack.c.h.b16 %v1536
        %v1606 = vunpack.c.l.b16 %v1537
        %v1607 = vunpack.c.h.b16 %v1537
        %v1608 = vunpack.c.l.b16 %v1538
        %v1609 = vunpack.c.h.b16 %v1538
        %v1610 = vunpack.c.l.b16 %v1539
        %v1611 = vunpack.c.h.b16 %v1539
        %v1612 = vunpack.c.l.b16 %v1540
        %v1613 = vunpack.c.h.b16 %v1540
        %v1614 = vunpack.c.l.b16 %v1541
        %v1615 = vunpack.c.h.b16 %v1541
        %v1616 = vunpack.c.l.b16 %v1542
        %v1617 = vunpack.c.h.b16 %v1542
        %v1618 = vunpack.c.l.b16 %v1543
        %v1619 = vunpack.c.h.b16 %v1543
        %v1620 = vunpack.c.l.b16 %v1544
        %v1621 = vunpack.c.h.b16 %v1544
        %v1622 = vunpack.c.l.b16 %v1545
        %v1623 = vunpack.c.h.b16 %v1545
        %v1624 = vunpack.c.l.b16 %v1546
        %v1625 = vunpack.c.h.b16 %v1546
        %v1626 = vunpack.c.l.b16 %v1547
        %v1627 = vunpack.c.h.b16 %v1547
        %v1628 = vunpack.c.l.b16 %v1548
        %v1629 = vunpack.c.h.b16 %v1548
        %v1630 = vunpack.c.l.b16 %v1549
        %v1631 = vunpack.c.h.b16 %v1549
        %v1632 = vunpack.c.l.b16 %v1550
        %v1633 = vunpack.c.h.b16 %v1550
        %v1634 = vunpack.c.l.b16 %v1551
        %v1635 = vunpack.c.h.b16 %v1551
        %v1636 = vunpack.c.l.b16 %v1552
        %v1637 = vunpack.c.h.b16 %v1552
        %v1638 = vunpack.c.l.b16 %v1553
        %v1639 = vunpack.c.h.b16 %v1553
        %v1640 = vunpack.c.l.b16 %v1554
        %v1641 = vunpack.c.h.b16 %v1554
        %v1642 = vunpack.c.l.b16 %v1555
        %v1643 = vunpack.c.h.b16 %v1555
        %v1644 = vunpack.c.l.b16 %v1556
        %v1645 = vunpack.c.h.b16 %v1556
        %v1646 = vunpack.c.l.b16 %v1557
        %v1647 = vunpack.c.h.b16 %v1557
        %v1648 = vunpack.c.l.b16 %v1558
        %v1649 = vunpack.c.h.b16 %v1558
        %v1650 = vunpack.c.l.b16 %v1559
        %v1651 = vunpack.c.h.b16 %v1559
        %v1652 = vunpack.c.l.b16 %v1560
        %v1653 = vunpack.c.h.b16 %v1560
        %v1654 = vunpack.c.l.b16 %v1561
        %v1655 = vunpack.c.h.b16 %v1561
        %v1656 = vunpack.c.l.b16 %v1562
        %v1657 = vunpack.c.h.b16 %v1562
        %v1658 = vunpack.c.l.b16 %v1563
        %v1659 = vunpack.c.h.b16 %v1563
        %v1660 = vunpack.c.l.b16 %v1564
        %v1661 = vunpack.c.h.b16 %v1564
        %v1662 = vpack.c.b16 %v1600, %v1598
        %v1663 = vpack.c.b16 %v1601, %v1599
        %v1664 = vpack.c.b16 %v1604, %v1602
        %v1665 = vpack.c.b16 %v1605, %v1603
        %v1666 = vpack.c.b16 %v1608, %v1606
        %v1667 = vpack.c.b16 %v1609, %v1607
        %v1668 = vpack.c.b16 %v1612, %v1610
        %v1669 = vpack.c.b16 %v1613, %v1611
        %v1670 = vpack.c.b16 %v1616, %v1614
        %v1671 = vpack.c.b16 %v1617, %v1615
        %v1672 = vpack.c.b16 %v1620, %v1618
        %v1673 = vpack.c.b16 %v1621, %v1619
        %v1674 = vpack.c.b16 %v1624, %v1622
        %v1675 = vpack.c.b16 %v1625, %v1623
        %v1676 = vpack.c.b16 %v1628, %v1626
        %v1677 = vpack.c.b16 %v1629, %v1627
        %v1678 = vpack.c.b16 %v1632, %v1630
        %v1679 = vpack.c.b16 %v1633, %v1631
        %v1680 = vpack.c.b16 %v1636, %v1634
        %v1681 = vpack.c.b16 %v1637, %v1635
        %v1682 = vpack.c.b16 %v1640, %v1638
        %v1683 = vpack.c.b16 %v1641, %v1639
        %v1684 = vpack.c.b16 %v1644, %v1642
        %v1685 = vpack.c.b16 %v1645, %v1643
        %v1686 = vpack.c.b16 %v1648, %v1646
        %v1687 = vpack.c.b16 %v1649, %v1647
        %v1688 = vpack.c.b16 %v1652, %v1650
        %v1689 = vpack.c.b16 %v1653, %v1651
        %v1690 = vpack.c.b16 %v1656, %v1654
        %v1691 = vpack.c.b16 %v1657, %v1655
        %v1692 = vpack.c.b16 %v1660, %v1658
        %v1693 = vpack.c.b16 %v1661, %v1659
        %v1727 = vlaneseq
        %v1728 = vshrl.u32 %v1727, 7
        %v1729 = vsub.s32 0, %v1728
        %v1730 = vrot.slane %v1565, %v1729
        %v1731 = vlaneseq
        %v1732 = vshrl.u32 %v1731, 7
        %v1733 = vsub.s32 1, %v1732
        %v1734 = vrot.slane %v1565, %v1733
        %1737 = vmatprep.subr.bf16.mxu0 %v1663
        %1738 = vmatpush1.bf16.msra.mxu0 %v1662
        %1739 = vmatprep.subr.bf16.mxu0 %v1665
        %1740 = vmatpush1.bf16.msra.mxu0 %v1664
        %1741 = vmatprep.subr.bf16.mxu0 %v1667
        %1742 = vmatpush1.bf16.msra.mxu0 %v1666
        %1743 = vmatprep.subr.bf16.mxu0 %v1669
        %1744 = vmatpush1.bf16.msra.mxu0 %v1668
        %1745 = vmatprep.subr.bf16.mxu0 %v1671
        %1746 = vmatpush1.bf16.msra.mxu0 %v1670
        %1747 = vmatprep.subr.bf16.mxu0 %v1673
        %1748 = vmatpush1.bf16.msra.mxu0 %v1672
        %1749 = vmatprep.subr.bf16.mxu0 %v1675
        %1750 = vmatpush1.bf16.msra.mxu0 %v1674
        %1751 = vmatprep.subr.bf16.mxu0 %v1677
        %1752 = vmatpush1.bf16.msra.mxu0 %v1676
        %1753 = vmatprep.subr.bf16.mxu0 %v1679
        %1754 = vmatpush1.bf16.msra.mxu0 %v1678
        %1755 = vmatprep.subr.bf16.mxu0 %v1681
        %1756 = vmatpush1.bf16.msra.mxu0 %v1680
        %1757 = vmatprep.subr.bf16.mxu0 %v1683
        %1758 = vmatpush1.bf16.msra.mxu0 %v1682
        %1759 = vmatprep.subr.bf16.mxu0 %v1685
        %1760 = vmatpush1.bf16.msra.mxu0 %v1684
        %1761 = vmatprep.subr.bf16.mxu0 %v1687
        %1762 = vmatpush1.bf16.msra.mxu0 %v1686
        %1763 = vmatprep.subr.bf16.mxu0 %v1689
        %1764 = vmatpush1.bf16.msra.mxu0 %v1688
        %1765 = vmatprep.subr.bf16.mxu0 %v1691
        %1766 = vmatpush1.bf16.msra.mxu0 %v1690
        %1767 = vmatprep.subr.bf16.mxu0 %v1693
        %1768 = vmatpush1.bf16.msra.mxu0 %v1692
        %1769 = vmatprep.mubr.bf16.mxu0 %v1532
        %1770 = vmatmul.mubr.bf16.gmra.mrb[0].mxu0 %v1531
        %v1771 = vpop.f32.mrb[0].mxu0
        %v1772 = vadd.f32 %v1730, %v1771
        %v1773 = vpop.f32.mrb[0].mxu0
        %v1774 = vadd.f32 %v1734, %v1773
        %v1775 = vpop.f32.mrb[0].mxu0
        %v1776 = vpop.f32.mrb[0].mxu0
        %1777 = vdwg.mxu0
        %v1780 = vcombine.low %v1772, %v1774
        %v1782 = vunpack.c.l.s4 1966171168
        %v1783 = vunpack.c.0.s8 %v1782
        %v1784 = vlaneseq
        %v1785 = vshrl.u32 %v1784, 7
        %v1786 = vsub.s32 %v1783, %v1785
        %v1787 = vrot.slane %v1780, %v1786
        %v1789 = vunpack.c.l.s4 1966171168
        %v1790 = vunpack.c.0.s8 %v1789
        %v1791 = vlaneseq
        %v1792 = vshrl.u32 %v1791, 7
        %v1793 = vsub.s32 %v1790, %v1792
        %v1794 = vrot.slane %v1787, %v1793
        %v1796 = vlaneseq
        %vm1797 = vcmp.ge.s32.totalorder %v1796, 0
        %vm1798 = vcmp.lt.s32.totalorder %v1796, 256
        %vm1799 = vmand %vm1797, %vm1798
        %1800 = vst.msk [vmem:[%s588] sm:$0x3] %vm1799, %v1794
        %p1801 = scmp.lt.s32.totalorder %s30, 1
        %s1802 = scalar_select %p1801, %s30, 1
        %s1803 = smul.addr %s1802, 2
        %s1804 = scalar_lea.vmem %s14, %s1803
        // Predicated region
        $region113: #{redimnet_forward.1} parent=75 // pred_check
          %p1805 = pneg %p347
        $region114: #{redimnet_forward.1} parent=75 // pred_check_branch
          %1807 = sbr.rel (%p1805) target = $region116
        $region115: #{redimnet_forward.1} parent=75 // pred_region
          _
        $region116: #{redimnet_forward.1} parent=75 // pred_fallthru
          _
      $region76: #{redimnet_forward.1} parent=5 // pred_fallthru
        _
      %p1808 = scmp.le.s32.totalorder 2, %s25
      // Predicated region
      $region117: #{redimnet_forward.1} parent=5 // pred_check
        %p1809 = pneg %p1808
      $region118: #{redimnet_forward.1} parent=5 // pred_check_branch
        %1811 = sbr.rel (%p1809) target = $region120
      $region119: #{redimnet_forward.1} parent=5 // pred_region
        %s1812 = ssub.s32 %s25, 2
        // Predicated region
        $region121: #{redimnet_forward.1} parent=119 // pred_check
          %p1813 = pneg %p353
        $region122: #{redimnet_forward.1} parent=119 // pred_check_branch
          %1815 = sbr.rel (%p1813) target = $region124
        $region123: #{redimnet_forward.1} parent=119 // pred_region
          %p1816 = scmp.lt.s32.totalorder %s31, 1
          %s1817 = scalar_select %p1816, %s31, 1
          %s1818 = smul.addr %s1817, 2
          %s1819 = scalar_lea.vmem %s14, %s1818
        $region124: #{redimnet_forward.1} parent=119 // pred_fallthru
          _
      $region120: #{redimnet_forward.1} parent=5 // pred_fallthru
        _
    $region6: #{redimnet_forward.1} parent=1 // loop_footer
      %s29 = sadd.s32 1, %s25
    $region7: #{redimnet_forward.1} parent=1 // loop_footer_branch
      %24 = sbr.rel target = $region3
    $region8: #{redimnet_forward.1} parent=1 // loop_exit
      _
    %1820 = vsyncpa [#allocation3], 1
    %s1821 = scalar_lea.sflag [#allocation3], 1
    %1822 = vsyncpa %s1821, 1
    %1823 = vsyncpa [#allocation5], 1
    %1824 = vsyncpa [#allocation8], 1
    %1825 = vsyncpa [#allocation11], 1
    %1826 = vsyncpa [#allocation14], 1

</llo_original>
